<compile_context>
chip_gen: v5e
topology: v5e:2x2
jax: 0.10.0
libtpu: 0.0.40
codegen_flags: <defaults>
</compile_context>

<pallas_src>
import functools

import jax
import jax.numpy as jnp
from jax.experimental import pallas as pl
from jax.experimental.pallas import tpu as pltpu


def _make_kernel(num_layers, hidden_size, seq_len, batch_pad):
    L, H, T, Bp = num_layers, hidden_size, seq_len, batch_pad

    def kernel(*refs):
        x_ref = refs[0]                       # (T*Bp, In0) bf16
        layer_refs = refs[1:1 + 3 * L]        # per layer: W_ih (In,4H) bf16, W_hh (H,4H) bf16, b (1,4H) f32
        wfc_ref = refs[1 + 3 * L]             # (H, C) f32
        bfc_ref = refs[2 + 3 * L]             # (1, C) f32
        out_ref = refs[3 + 3 * L]             # (Bp, C) f32
        gx_scr = refs[4 + 3 * L]              # (T*Bp, 4H) f32 scratch: hoisted gate inputs
        seq_scr = refs[5 + 3 * L]             # (T*Bp, H)  f32 scratch: layer outputs over time

        layer_in = x_ref[...]                 # bf16 (T*Bp, In_l)
        h_top = jnp.zeros((Bp, H), jnp.float32)

        for l in range(L):
            wih = layer_refs[3 * l][...]      # (In_l, 4H) bf16
            whh = layer_refs[3 * l + 1][...]  # (H, 4H)    bf16
            b = layer_refs[3 * l + 2][...]    # (1, 4H)    f32

            # Hoisted input projection for ALL timesteps: one big MXU matmul
            # (rows = T*Bp instead of B), bias added once per layer.
            gx_scr[...] = (
                jnp.dot(layer_in, wih, preferred_element_type=jnp.float32) + b)

            write_seq = l < L - 1  # last layer only needs its final h

            def step(t, carry, whh=whh, write_seq=write_seq):
                h, c = carry
                row = pl.multiple_of(t * Bp, Bp)  # Bp is a multiple of 8 -> aligned tiles
                gates = gx_scr[pl.ds(row, Bp), :] + jnp.dot(
                    h.astype(jnp.bfloat16), whh,
                    preferred_element_type=jnp.float32)          # (Bp, 4H)
                i_g = jax.nn.sigmoid(gates[:, 0 * H:1 * H])
                f_g = jax.nn.sigmoid(gates[:, 1 * H:2 * H])
                g_g = jnp.tanh(gates[:, 2 * H:3 * H])
                o_g = jax.nn.sigmoid(gates[:, 3 * H:4 * H])
                c_new = f_g * c + i_g * g_g
                h_new = o_g * jnp.tanh(c_new)
                if write_seq:
                    seq_scr[pl.ds(row, Bp), :] = h_new
                return h_new, c_new

            h0 = jnp.zeros((Bp, H), jnp.float32)
            c0 = jnp.zeros((Bp, H), jnp.float32)
            h_last, _ = jax.lax.fori_loop(0, T, step, (h0, c0), unroll=True)
            h_top = h_last
            if write_seq:
                layer_in = seq_scr[...].astype(jnp.bfloat16)

        # fc + sigmoid epilogue (runs once). f32 weights, f32 state.
        logits = jnp.dot(h_top, wfc_ref[...],
                         preferred_element_type=jnp.float32) + bfc_ref[...]
        out_ref[...] = jax.nn.sigmoid(logits)

    return kernel


def lstm_forward(x, params, *, hidden_size, num_layers, num_classes):
    """x: (B, T, C, Hgt, W) float32. Returns (B, num_classes) float32."""
    B, T = x.shape[0], x.shape[1]
    in_size = x.shape[2] * x.shape[3] * x.shape[4]
    H = hidden_size
    Bp = ((B + 7) // 8) * 8               # pad batch to a sublane multiple
    assert T >= 1, "sequence length must be >= 1"

    # One-time JAX glue (fused by XLA): flatten spatial dims, go time-major,
    # pad batch, and present a single (T*Bp, In) bf16 slab so the hoisted
    # per-layer input projection is one MXU matmul.
    x_tm = jnp.transpose(x.reshape(B, T, in_size), (1, 0, 2))   # (T, B, In)
    x_tm = jnp.pad(x_tm, ((0, 0), (0, Bp - B), (0, 0)))         # (T, Bp, In)
    x2d = x_tm.reshape(T * Bp, in_size).astype(jnp.bfloat16)

    kernel = _make_kernel(num_layers, H, T, Bp)

    args = [x2d]
    in_specs = [pl.BlockSpec((T * Bp, in_size), lambda i: (0, 0))]
    for l in range(num_layers):
        wih, whh, bih, bhh = params["layers"][l]
        wih_t = wih.T.astype(jnp.bfloat16)                       # (In_l, 4H)
        whh_t = whh.T.astype(jnp.bfloat16)                       # (H, 4H)
        b = (bih + bhh).reshape(1, 4 * H).astype(jnp.float32)    # (1, 4H)
        for a in (wih_t, whh_t, b):
            args.append(a)
            in_specs.append(pl.BlockSpec(a.shape, lambda i: (0, 0)))
    wfc, bfc = params["fc"]
    wfc_t = wfc.T.astype(jnp.float32)                            # (H, C)
    bfc2 = bfc.reshape(1, num_classes).astype(jnp.float32)       # (1, C)
    for a in (wfc_t, bfc2):
        args.append(a)
        in_specs.append(pl.BlockSpec(a.shape, lambda i: (0, 0)))

    out = pl.pallas_call(
        kernel,
        out_shape=jax.ShapeDtypeStruct((Bp, num_classes), jnp.float32),
        grid_spec=pltpu.PrefetchScalarGridSpec(
            num_scalar_prefetch=0,
            grid=(1,),
            in_specs=in_specs,
            out_specs=pl.BlockSpec((Bp, num_classes), lambda i: (0, 0)),
            scratch_shapes=[
                pltpu.VMEM((T * Bp, 4 * H), jnp.float32),   # hoisted gate inputs
                pltpu.VMEM((T * Bp, H), jnp.float32),       # layer outputs over time
            ],
        ),
        compiler_params=pltpu.CompilerParams(
            dimension_semantics=("arbitrary",),
            vmem_limit_bytes=32 * 1024 * 1024,
        ),
    )(*args)
    # TODO(synk): for realistic H (>=1024) on v7x (64 MiB VMEM), tile the 4H
    # dimension of W_ih/W_hh with an extra grid axis (and block long T) instead
    # of keeping every layer's weights and the whole sequence resident.
    return out[:B]


def init_params(key, input_size, hidden_size, num_layers, num_classes):
    """Deterministic synthetic parameters, PyTorch-shaped."""
    keys = jax.random.split(key, 4 * num_layers + 2)
    scale = 0.1
    layers = []
    for l in range(num_layers):
        in_dim = input_size if l == 0 else hidden_size
        k = keys[4 * l:4 * l + 4]
        wih = scale * jax.random.normal(k[0], (4 * hidden_size, in_dim), jnp.float32)
        whh = scale * jax.random.normal(k[1], (4 * hidden_size, hidden_size), jnp.float32)
        bih = scale * jax.random.normal(k[2], (4 * hidden_size,), jnp.float32)
        bhh = scale * jax.random.normal(k[3], (4 * hidden_size,), jnp.float32)
        layers.append((wih, whh, bih, bhh))
    wfc = scale * jax.random.normal(keys[-2], (num_classes, hidden_size), jnp.float32)
    bfc = scale * jax.random.normal(keys[-1], (num_classes,), jnp.float32)
    return {"layers": layers, "fc": (wfc, bfc)}


def lstm_reference(x, params, *, hidden_size, num_layers, num_classes):
    """Pure-JAX reference mirroring PyTorch nn.LSTM(batch_first=True)+fc+sigmoid,
    with matmul operands rounded to bf16 (as in the kernel) and f32 accumulation."""
    def bf16(a):
        return a.astype(jnp.bfloat16).astype(jnp.float32)

    B, T = x.shape[0], x.shape[1]
    xs = x.reshape(B, T, -1)
    H = hidden_size
    h = [jnp.zeros((B, H), jnp.float32) for _ in range(num_layers)]
    c = [jnp.zeros((B, H), jnp.float32) for _ in range(num_layers)]
    for t in range(T):
        inp = xs[:, t, :]
        for l in range(num_layers):
            wih, whh, bih, bhh = params["layers"][l]
            gates = (bf16(inp) @ bf16(wih).T + bf16(h[l]) @ bf16(whh).T
                     + bih + bhh)
            i_g = jax.nn.sigmoid(gates[:, 0 * H:1 * H])
            f_g = jax.nn.sigmoid(gates[:, 1 * H:2 * H])
            g_g = jnp.tanh(gates[:, 2 * H:3 * H])
            o_g = jax.nn.sigmoid(gates[:, 3 * H:4 * H])
            c[l] = f_g * c[l] + i_g * g_g
            h[l] = o_g * jnp.tanh(c[l])
            inp = h[l]
    wfc, bfc = params["fc"]
    return jax.nn.sigmoid(h[-1] @ wfc.T + bfc.reshape(1, -1))


if __name__ == "__main__":
    B, T, C, Hgt, W = 2, 8, 4, 4, 4          # input_size = C*Hgt*W = 64
    hidden_size, num_layers, num_classes = 32, 2, 5

    key = jax.random.PRNGKey(0)
    kx, kp = jax.random.split(key)
    x = jax.random.normal(kx, (B, T, C, Hgt, W), jnp.float32)
    params = init_params(kp, C * Hgt * W, hidden_size, num_layers, num_classes)

    fwd = functools.partial(lstm_forward, hidden_size=hidden_size,
                            num_layers=num_layers, num_classes=num_classes)
    out = jax.block_until_ready(jax.jit(fwd)(x, params))

    ref = lstm_reference(x, params, hidden_size=hidden_size,
                         num_layers=num_layers, num_classes=num_classes)
    assert out.shape == (B, num_classes)
    assert jnp.allclose(out, ref, atol=2e-3, rtol=2e-3), (out, ref)
    print("KERNEL_OK")
</pallas_src>

<mosaic_0001>
module attributes {stable_mosaic.version = 11 : i64} {
  func.func @kernel(%arg0: i32, %arg1: memref<64x64xbf16, #tpu.memory_space<vmem>>, %arg2: memref<64x128xbf16, #tpu.memory_space<vmem>>, %arg3: memref<32x128xbf16, #tpu.memory_space<vmem>>, %arg4: memref<1x128xf32, #tpu.memory_space<vmem>>, %arg5: memref<32x128xbf16, #tpu.memory_space<vmem>>, %arg6: memref<32x128xbf16, #tpu.memory_space<vmem>>, %arg7: memref<1x128xf32, #tpu.memory_space<vmem>>, %arg8: memref<32x5xf32, #tpu.memory_space<vmem>>, %arg9: memref<1x5xf32, #tpu.memory_space<vmem>>, %arg10: memref<8x5xf32, #tpu.memory_space<vmem>>, %arg11: memref<64x128xf32, #tpu.memory_space<vmem>>, %arg12: memref<64x32xf32, #tpu.memory_space<vmem>>) attributes {dimension_semantics = [#tpu.dimension_semantics<arbitrary>], iteration_bounds = array<i64: 1>, scalar_prefetch = 0 : i64, scratch_operands = 2 : i64, tpu.core_type = #tpu.core_type<tc>, window_params = [{pipeline_mode = #tpu.pipeline_mode<synchronous>, transform_indices = @transform_0, window_bounds = array<i64: 64, 64>}, {pipeline_mode = #tpu.pipeline_mode<synchronous>, transform_indices = @transform_1, window_bounds = array<i64: 64, 128>}, {pipeline_mode = #tpu.pipeline_mode<synchronous>, transform_indices = @transform_2, window_bounds = array<i64: 32, 128>}, {pipeline_mode = #tpu.pipeline_mode<synchronous>, transform_indices = @transform_3, window_bounds = array<i64: 1, 128>}, {pipeline_mode = #tpu.pipeline_mode<synchronous>, transform_indices = @transform_4, window_bounds = array<i64: 32, 128>}, {pipeline_mode = #tpu.pipeline_mode<synchronous>, transform_indices = @transform_5, window_bounds = array<i64: 32, 128>}, {pipeline_mode = #tpu.pipeline_mode<synchronous>, transform_indices = @transform_6, window_bounds = array<i64: 1, 128>}, {pipeline_mode = #tpu.pipeline_mode<synchronous>, transform_indices = @transform_7, window_bounds = array<i64: 32, 5>}, {pipeline_mode = #tpu.pipeline_mode<synchronous>, transform_indices = @transform_8, window_bounds = array<i64: 1, 5>}, {pipeline_mode = #tpu.pipeline_mode<synchronous>, transform_indices = @transform_9, window_bounds = array<i64: 8, 5>}]} {
    %c0 = arith.constant 0 : index
    %c0_0 = arith.constant 0 : index
    %0 = vector.load %arg1[%c0, %c0_0] : memref<64x64xbf16, #tpu.memory_space<vmem>>, vector<64x64xbf16>
    %c0_1 = arith.constant 0 : index
    %c0_2 = arith.constant 0 : index
    %1 = vector.load %arg2[%c0_1, %c0_2] : memref<64x128xbf16, #tpu.memory_space<vmem>>, vector<64x128xbf16>
    %c0_3 = arith.constant 0 : index
    %c0_4 = arith.constant 0 : index
    %2 = vector.load %arg3[%c0_3, %c0_4] : memref<32x128xbf16, #tpu.memory_space<vmem>>, vector<32x128xbf16>
    %c0_5 = arith.constant 0 : index
    %c0_6 = arith.constant 0 : index
    %3 = vector.load %arg4[%c0_5, %c0_6] : memref<1x128xf32, #tpu.memory_space<vmem>>, vector<1x128xf32>
    %cst = arith.constant dense<0.000000e+00> : vector<64x128xf32>
    %4 = tpu.matmul %0, %1, %cst {dimension_numbers = #tpu.dot_dimension_numbers<[1], [0], [0], [1], [0, 0, 1, 1], [], []>} : vector<64x64xbf16>, vector<64x128xbf16>, vector<64x128xf32> -> vector<64x128xf32>
    %5 = vector.broadcast %3 : vector<1x128xf32> to vector<64x128xf32>
    %6 = arith.addf %4, %5 : vector<64x128xf32>
    %c0_7 = arith.constant 0 : index
    %c0_8 = arith.constant 0 : index
    %7 = vector.load %arg11[%c0_7, %c0_8] : memref<64x128xf32, #tpu.memory_space<vmem>>, vector<64x128xf32>
    tpu.vector_store %arg11[%c0_7, %c0_8], %6 {strides = array<i32>} : memref<64x128xf32, #tpu.memory_space<vmem>>, vector<64x128xf32>,
    %cst_9 = arith.constant 0.000000e+00 : f32
    %8 = vector.broadcast %cst_9 : f32 to vector<8x32xf32>
    %cst_10 = arith.constant 0.000000e+00 : f32
    %9 = vector.broadcast %cst_10 : f32 to vector<8x32xf32>
    %c0_i32 = arith.constant 0 : i32
    %c8_i32 = arith.constant 8 : i32
    %10 = arith.muli %c0_i32, %c8_i32 : i32
    %11 = tpu.assume_multiple %10, 8 : i32
    %12 = arith.index_cast %11 : i32 to index
    %c0_11 = arith.constant 0 : index
    %13 = vector.load %arg11[%12, %c0_11] : memref<64x128xf32, #tpu.memory_space<vmem>>, vector<8x128xf32>
    %14 = arith.truncf %8 : vector<8x32xf32> to vector<8x32xbf16>
    %cst_12 = arith.constant dense<0.000000e+00> : vector<8x128xf32>
    %15 = tpu.matmul %14, %2, %cst_12 {dimension_numbers = #tpu.dot_dimension_numbers<[1], [0], [0], [1], [0, 0, 1, 1], [], []>} : vector<8x32xbf16>, vector<32x128xbf16>, vector<8x128xf32> -> vector<8x128xf32>
    %16 = arith.addf %13, %15 : vector<8x128xf32>
    %17 = vector.extract_strided_slice %16 {offsets = [0, 0], sizes = [8, 32], strides = [1, 1]} : vector<8x128xf32> to vector<8x32xf32>
    %18 = arith.negf %17 : vector<8x32xf32>
    %19 = math.exp %18 : vector<8x32xf32>
    %cst_13 = arith.constant 1.000000e+00 : f32
    %20 = vector.broadcast %cst_13 : f32 to vector<8x32xf32>
    %21 = arith.addf %20, %19 : vector<8x32xf32>
    %22 = arith.divf %20, %21 : vector<8x32xf32>
    %23 = vector.extract_strided_slice %16 {offsets = [0, 32], sizes = [8, 32], strides = [1, 1]} : vector<8x128xf32> to vector<8x32xf32>
    %24 = arith.negf %23 : vector<8x32xf32>
    %25 = math.exp %24 : vector<8x32xf32>
    %cst_14 = arith.constant 1.000000e+00 : f32
    %26 = vector.broadcast %cst_14 : f32 to vector<8x32xf32>
    %27 = arith.addf %26, %25 : vector<8x32xf32>
    %28 = arith.divf %26, %27 : vector<8x32xf32>
    %29 = vector.extract_strided_slice %16 {offsets = [0, 64], sizes = [8, 32], strides = [1, 1]} : vector<8x128xf32> to vector<8x32xf32>
    %30 = math.tanh %29 : vector<8x32xf32>
    %31 = vector.extract_strided_slice %16 {offsets = [0, 96], sizes = [8, 32], strides = [1, 1]} : vector<8x128xf32> to vector<8x32xf32>
    %32 = arith.negf %31 : vector<8x32xf32>
    %33 = math.exp %32 : vector<8x32xf32>
    %cst_15 = arith.constant 1.000000e+00 : f32
    %34 = vector.broadcast %cst_15 : f32 to vector<8x32xf32>
    %35 = arith.addf %34, %33 : vector<8x32xf32>
    %36 = arith.divf %34, %35 : vector<8x32xf32>
    %37 = arith.mulf %28, %9 : vector<8x32xf32>
    %38 = arith.mulf %22, %30 : vector<8x32xf32>
    %39 = arith.addf %37, %38 : vector<8x32xf32>
    %40 = math.tanh %39 : vector<8x32xf32>
    %41 = arith.mulf %36, %40 : vector<8x32xf32>
    %42 = arith.index_cast %11 : i32 to index
    %c0_16 = arith.constant 0 : index
    %43 = vector.load %arg12[%42, %c0_16] : memref<64x32xf32, #tpu.memory_space<vmem>>, vector<8x32xf32>
    tpu.vector_store %arg12[%42, %c0_16], %41 {strides = array<i32>} : memref<64x32xf32, #tpu.memory_space<vmem>>, vector<8x32xf32>,
    %c1_i32 = arith.constant 1 : i32
    %c8_i32_17 = arith.constant 8 : i32
    %44 = arith.muli %c1_i32, %c8_i32_17 : i32
    %45 = tpu.assume_multiple %44, 8 : i32
    %46 = arith.index_cast %45 : i32 to index
    %c0_18 = arith.constant 0 : index
    %47 = vector.load %arg11[%46, %c0_18] : memref<64x128xf32, #tpu.memory_space<vmem>>, vector<8x128xf32>
    %48 = arith.truncf %41 : vector<8x32xf32> to vector<8x32xbf16>
    %cst_19 = arith.constant dense<0.000000e+00> : vector<8x128xf32>
    %49 = tpu.matmul %48, %2, %cst_19 {dimension_numbers = #tpu.dot_dimension_numbers<[1], [0], [0], [1], [0, 0, 1, 1], [], []>} : vector<8x32xbf16>, vector<32x128xbf16>, vector<8x128xf32> -> vector<8x128xf32>
    %50 = arith.addf %47, %49 : vector<8x128xf32>
    %51 = vector.extract_strided_slice %50 {offsets = [0, 0], sizes = [8, 32], strides = [1, 1]} : vector<8x128xf32> to vector<8x32xf32>
    %52 = arith.negf %51 : vector<8x32xf32>
    %53 = math.exp %52 : vector<8x32xf32>
    %cst_20 = arith.constant 1.000000e+00 : f32
    %54 = vector.broadcast %cst_20 : f32 to vector<8x32xf32>
    %55 = arith.addf %54, %53 : vector<8x32xf32>
    %56 = arith.divf %54, %55 : vector<8x32xf32>
    %57 = vector.extract_strided_slice %50 {offsets = [0, 32], sizes = [8, 32], strides = [1, 1]} : vector<8x128xf32> to vector<8x32xf32>
    %58 = arith.negf %57 : vector<8x32xf32>
    %59 = math.exp %58 : vector<8x32xf32>
    %cst_21 = arith.constant 1.000000e+00 : f32
    %60 = vector.broadcast %cst_21 : f32 to vector<8x32xf32>
    %61 = arith.addf %60, %59 : vector<8x32xf32>
    %62 = arith.divf %60, %61 : vector<8x32xf32>
    %63 = vector.extract_strided_slice %50 {offsets = [0, 64], sizes = [8, 32], strides = [1, 1]} : vector<8x128xf32> to vector<8x32xf32>
    %64 = math.tanh %63 : vector<8x32xf32>
    %65 = vector.extract_strided_slice %50 {offsets = [0, 96], sizes = [8, 32], strides = [1, 1]} : vector<8x128xf32> to vector<8x32xf32>
    %66 = arith.negf %65 : vector<8x32xf32>
    %67 = math.exp %66 : vector<8x32xf32>
    %cst_22 = arith.constant 1.000000e+00 : f32
    %68 = vector.broadcast %cst_22 : f32 to vector<8x32xf32>
    %69 = arith.addf %68, %67 : vector<8x32xf32>
    %70 = arith.divf %68, %69 : vector<8x32xf32>
    %71 = arith.mulf %62, %39 : vector<8x32xf32>
    %72 = arith.mulf %56, %64 : vector<8x32xf32>
    %73 = arith.addf %71, %72 : vector<8x32xf32>
    %74 = math.tanh %73 : vector<8x32xf32>
    %75 = arith.mulf %70, %74 : vector<8x32xf32>
    %76 = arith.index_cast %45 : i32 to index
    %c0_23 = arith.constant 0 : index
    %77 = vector.load %arg12[%76, %c0_23] : memref<64x32xf32, #tpu.memory_space<vmem>>, vector<8x32xf32>
    tpu.vector_store %arg12[%76, %c0_23], %75 {strides = array<i32>} : memref<64x32xf32, #tpu.memory_space<vmem>>, vector<8x32xf32>,
    %c2_i32 = arith.constant 2 : i32
    %c8_i32_24 = arith.constant 8 : i32
    %78 = arith.muli %c2_i32, %c8_i32_24 : i32
    %79 = tpu.assume_multiple %78, 8 : i32
    %80 = arith.index_cast %79 : i32 to index
    %c0_25 = arith.constant 0 : index
    %81 = vector.load %arg11[%80, %c0_25] : memref<64x128xf32, #tpu.memory_space<vmem>>, vector<8x128xf32>
    %82 = arith.truncf %75 : vector<8x32xf32> to vector<8x32xbf16>
    %cst_26 = arith.constant dense<0.000000e+00> : vector<8x128xf32>
    %83 = tpu.matmul %82, %2, %cst_26 {dimension_numbers = #tpu.dot_dimension_numbers<[1], [0], [0], [1], [0, 0, 1, 1], [], []>} : vector<8x32xbf16>, vector<32x128xbf16>, vector<8x128xf32> -> vector<8x128xf32>
    %84 = arith.addf %81, %83 : vector<8x128xf32>
    %85 = vector.extract_strided_slice %84 {offsets = [0, 0], sizes = [8, 32], strides = [1, 1]} : vector<8x128xf32> to vector<8x32xf32>
    %86 = arith.negf %85 : vector<8x32xf32>
    %87 = math.exp %86 : vector<8x32xf32>
    %cst_27 = arith.constant 1.000000e+00 : f32
    %88 = vector.broadcast %cst_27 : f32 to vector<8x32xf32>
    %89 = arith.addf %88, %87 : vector<8x32xf32>
    %90 = arith.divf %88, %89 : vector<8x32xf32>
    %91 = vector.extract_strided_slice %84 {offsets = [0, 32], sizes = [8, 32], strides = [1, 1]} : vector<8x128xf32> to vector<8x32xf32>
    %92 = arith.negf %91 : vector<8x32xf32>
    %93 = math.exp %92 : vector<8x32xf32>
    %cst_28 = arith.constant 1.000000e+00 : f32
    %94 = vector.broadcast %cst_28 : f32 to vector<8x32xf32>
    %95 = arith.addf %94, %93 : vector<8x32xf32>
    %96 = arith.divf %94, %95 : vector<8x32xf32>
    %97 = vector.extract_strided_slice %84 {offsets = [0, 64], sizes = [8, 32], strides = [1, 1]} : vector<8x128xf32> to vector<8x32xf32>
    %98 = math.tanh %97 : vector<8x32xf32>
    %99 = vector.extract_strided_slice %84 {offsets = [0, 96], sizes = [8, 32], strides = [1, 1]} : vector<8x128xf32> to vector<8x32xf32>
    %100 = arith.negf %99 : vector<8x32xf32>
    %101 = math.exp %100 : vector<8x32xf32>
    %cst_29 = arith.constant 1.000000e+00 : f32
    %102 = vector.broadcast %cst_29 : f32 to vector<8x32xf32>
    %103 = arith.addf %102, %101 : vector<8x32xf32>
    %104 = arith.divf %102, %103 : vector<8x32xf32>
    %105 = arith.mulf %96, %73 : vector<8x32xf32>
    %106 = arith.mulf %90, %98 : vector<8x32xf32>
    %107 = arith.addf %105, %106 : vector<8x32xf32>
    %108 = math.tanh %107 : vector<8x32xf32>
    %109 = arith.mulf %104, %108 : vector<8x32xf32>
    %110 = arith.index_cast %79 : i32 to index
    %c0_30 = arith.constant 0 : index
    %111 = vector.load %arg12[%110, %c0_30] : memref<64x32xf32, #tpu.memory_space<vmem>>, vector<8x32xf32>
    tpu.vector_store %arg12[%110, %c0_30], %109 {strides = array<i32>} : memref<64x32xf32, #tpu.memory_space<vmem>>, vector<8x32xf32>,
    %c3_i32 = arith.constant 3 : i32
    %c8_i32_31 = arith.constant 8 : i32
    %112 = arith.muli %c3_i32, %c8_i32_31 : i32
    %113 = tpu.assume_multiple %112, 8 : i32
    %114 = arith.index_cast %113 : i32 to index
    %c0_32 = arith.constant 0 : index
    %115 = vector.load %arg11[%114, %c0_32] : memref<64x128xf32, #tpu.memory_space<vmem>>, vector<8x128xf32>
    %116 = arith.truncf %109 : vector<8x32xf32> to vector<8x32xbf16>
    %cst_33 = arith.constant dense<0.000000e+00> : vector<8x128xf32>
    %117 = tpu.matmul %116, %2, %cst_33 {dimension_numbers = #tpu.dot_dimension_numbers<[1], [0], [0], [1], [0, 0, 1, 1], [], []>} : vector<8x32xbf16>, vector<32x128xbf16>, vector<8x128xf32> -> vector<8x128xf32>
    %118 = arith.addf %115, %117 : vector<8x128xf32>
    %119 = vector.extract_strided_slice %118 {offsets = [0, 0], sizes = [8, 32], strides = [1, 1]} : vector<8x128xf32> to vector<8x32xf32>
    %120 = arith.negf %119 : vector<8x32xf32>
    %121 = math.exp %120 : vector<8x32xf32>
    %cst_34 = arith.constant 1.000000e+00 : f32
    %122 = vector.broadcast %cst_34 : f32 to vector<8x32xf32>
    %123 = arith.addf %122, %121 : vector<8x32xf32>
    %124 = arith.divf %122, %123 : vector<8x32xf32>
    %125 = vector.extract_strided_slice %118 {offsets = [0, 32], sizes = [8, 32], strides = [1, 1]} : vector<8x128xf32> to vector<8x32xf32>
    %126 = arith.negf %125 : vector<8x32xf32>
    %127 = math.exp %126 : vector<8x32xf32>
    %cst_35 = arith.constant 1.000000e+00 : f32
    %128 = vector.broadcast %cst_35 : f32 to vector<8x32xf32>
    %129 = arith.addf %128, %127 : vector<8x32xf32>
    %130 = arith.divf %128, %129 : vector<8x32xf32>
    %131 = vector.extract_strided_slice %118 {offsets = [0, 64], sizes = [8, 32], strides = [1, 1]} : vector<8x128xf32> to vector<8x32xf32>
    %132 = math.tanh %131 : vector<8x32xf32>
    %133 = vector.extract_strided_slice %118 {offsets = [0, 96], sizes = [8, 32], strides = [1, 1]} : vector<8x128xf32> to vector<8x32xf32>
    %134 = arith.negf %133 : vector<8x32xf32>
    %135 = math.exp %134 : vector<8x32xf32>
    %cst_36 = arith.constant 1.000000e+00 : f32
    %136 = vector.broadcast %cst_36 : f32 to vector<8x32xf32>
    %137 = arith.addf %136, %135 : vector<8x32xf32>
    %138 = arith.divf %136, %137 : vector<8x32xf32>
    %139 = arith.mulf %130, %107 : vector<8x32xf32>
    %140 = arith.mulf %124, %132 : vector<8x32xf32>
    %141 = arith.addf %139, %140 : vector<8x32xf32>
    %142 = math.tanh %141 : vector<8x32xf32>
    %143 = arith.mulf %138, %142 : vector<8x32xf32>
    %144 = arith.index_cast %113 : i32 to index
    %c0_37 = arith.constant 0 : index
    %145 = vector.load %arg12[%144, %c0_37] : memref<64x32xf32, #tpu.memory_space<vmem>>, vector<8x32xf32>
    tpu.vector_store %arg12[%144, %c0_37], %143 {strides = array<i32>} : memref<64x32xf32, #tpu.memory_space<vmem>>, vector<8x32xf32>,
    %c4_i32 = arith.constant 4 : i32
    %c8_i32_38 = arith.constant 8 : i32
    %146 = arith.muli %c4_i32, %c8_i32_38 : i32
    %147 = tpu.assume_multiple %146, 8 : i32
    %148 = arith.index_cast %147 : i32 to index
    %c0_39 = arith.constant 0 : index
    %149 = vector.load %arg11[%148, %c0_39] : memref<64x128xf32, #tpu.memory_space<vmem>>, vector<8x128xf32>
    %150 = arith.truncf %143 : vector<8x32xf32> to vector<8x32xbf16>
    %cst_40 = arith.constant dense<0.000000e+00> : vector<8x128xf32>
    %151 = tpu.matmul %150, %2, %cst_40 {dimension_numbers = #tpu.dot_dimension_numbers<[1], [0], [0], [1], [0, 0, 1, 1], [], []>} : vector<8x32xbf16>, vector<32x128xbf16>, vector<8x128xf32> -> vector<8x128xf32>
    %152 = arith.addf %149, %151 : vector<8x128xf32>
    %153 = vector.extract_strided_slice %152 {offsets = [0, 0], sizes = [8, 32], strides = [1, 1]} : vector<8x128xf32> to vector<8x32xf32>
    %154 = arith.negf %153 : vector<8x32xf32>
    %155 = math.exp %154 : vector<8x32xf32>
    %cst_41 = arith.constant 1.000000e+00 : f32
    %156 = vector.broadcast %cst_41 : f32 to vector<8x32xf32>
    %157 = arith.addf %156, %155 : vector<8x32xf32>
    %158 = arith.divf %156, %157 : vector<8x32xf32>
    %159 = vector.extract_strided_slice %152 {offsets = [0, 32], sizes = [8, 32], strides = [1, 1]} : vector<8x128xf32> to vector<8x32xf32>
    %160 = arith.negf %159 : vector<8x32xf32>
    %161 = math.exp %160 : vector<8x32xf32>
    %cst_42 = arith.constant 1.000000e+00 : f32
    %162 = vector.broadcast %cst_42 : f32 to vector<8x32xf32>
    %163 = arith.addf %162, %161 : vector<8x32xf32>
    %164 = arith.divf %162, %163 : vector<8x32xf32>
    %165 = vector.extract_strided_slice %152 {offsets = [0, 64], sizes = [8, 32], strides = [1, 1]} : vector<8x128xf32> to vector<8x32xf32>
    %166 = math.tanh %165 : vector<8x32xf32>
    %167 = vector.extract_strided_slice %152 {offsets = [0, 96], sizes = [8, 32], strides = [1, 1]} : vector<8x128xf32> to vector<8x32xf32>
    %168 = arith.negf %167 : vector<8x32xf32>
    %169 = math.exp %168 : vector<8x32xf32>
    %cst_43 = arith.constant 1.000000e+00 : f32
    %170 = vector.broadcast %cst_43 : f32 to vector<8x32xf32>
    %171 = arith.addf %170, %169 : vector<8x32xf32>
    %172 = arith.divf %170, %171 : vector<8x32xf32>
    %173 = arith.mulf %164, %141 : vector<8x32xf32>
    %174 = arith.mulf %158, %166 : vector<8x32xf32>
    %175 = arith.addf %173, %174 : vector<8x32xf32>
    %176 = math.tanh %175 : vector<8x32xf32>
    %177 = arith.mulf %172, %176 : vector<8x32xf32>
    %178 = arith.index_cast %147 : i32 to index
    %c0_44 = arith.constant 0 : index
    %179 = vector.load %arg12[%178, %c0_44] : memref<64x32xf32, #tpu.memory_space<vmem>>, vector<8x32xf32>
    tpu.vector_store %arg12[%178, %c0_44], %177 {strides = array<i32>} : memref<64x32xf32, #tpu.memory_space<vmem>>, vector<8x32xf32>,
    %c5_i32 = arith.constant 5 : i32
    %c8_i32_45 = arith.constant 8 : i32
    %180 = arith.muli %c5_i32, %c8_i32_45 : i32
    %181 = tpu.assume_multiple %180, 8 : i32
    %182 = arith.index_cast %181 : i32 to index
    %c0_46 = arith.constant 0 : index
    %183 = vector.load %arg11[%182, %c0_46] : memref<64x128xf32, #tpu.memory_space<vmem>>, vector<8x128xf32>
    %184 = arith.truncf %177 : vector<8x32xf32> to vector<8x32xbf16>
    %cst_47 = arith.constant dense<0.000000e+00> : vector<8x128xf32>
    %185 = tpu.matmul %184, %2, %cst_47 {dimension_numbers = #tpu.dot_dimension_numbers<[1], [0], [0], [1], [0, 0, 1, 1], [], []>} : vector<8x32xbf16>, vector<32x128xbf16>, vector<8x128xf32> -> vector<8x128xf32>
    %186 = arith.addf %183, %185 : vector<8x128xf32>
    %187 = vector.extract_strided_slice %186 {offsets = [0, 0], sizes = [8, 32], strides = [1, 1]} : vector<8x128xf32> to vector<8x32xf32>
    %188 = arith.negf %187 : vector<8x32xf32>
    %189 = math.exp %188 : vector<8x32xf32>
    %cst_48 = arith.constant 1.000000e+00 : f32
    %190 = vector.broadcast %cst_48 : f32 to vector<8x32xf32>
    %191 = arith.addf %190, %189 : vector<8x32xf32>
    %192 = arith.divf %190, %191 : vector<8x32xf32>
    %193 = vector.extract_strided_slice %186 {offsets = [0, 32], sizes = [8, 32], strides = [1, 1]} : vector<8x128xf32> to vector<8x32xf32>
    %194 = arith.negf %193 : vector<8x32xf32>
    %195 = math.exp %194 : vector<8x32xf32>
    %cst_49 = arith.constant 1.000000e+00 : f32
    %196 = vector.broadcast %cst_49 : f32 to vector<8x32xf32>
    %197 = arith.addf %196, %195 : vector<8x32xf32>
    %198 = arith.divf %196, %197 : vector<8x32xf32>
    %199 = vector.extract_strided_slice %186 {offsets = [0, 64], sizes = [8, 32], strides = [1, 1]} : vector<8x128xf32> to vector<8x32xf32>
    %200 = math.tanh %199 : vector<8x32xf32>
    %201 = vector.extract_strided_slice %186 {offsets = [0, 96], sizes = [8, 32], strides = [1, 1]} : vector<8x128xf32> to vector<8x32xf32>
    %202 = arith.negf %201 : vector<8x32xf32>
    %203 = math.exp %202 : vector<8x32xf32>
    %cst_50 = arith.constant 1.000000e+00 : f32
    %204 = vector.broadcast %cst_50 : f32 to vector<8x32xf32>
    %205 = arith.addf %204, %203 : vector<8x32xf32>
    %206 = arith.divf %204, %205 : vector<8x32xf32>
    %207 = arith.mulf %198, %175 : vector<8x32xf32>
    %208 = arith.mulf %192, %200 : vector<8x32xf32>
    %209 = arith.addf %207, %208 : vector<8x32xf32>
    %210 = math.tanh %209 : vector<8x32xf32>
    %211 = arith.mulf %206, %210 : vector<8x32xf32>
    %212 = arith.index_cast %181 : i32 to index
    %c0_51 = arith.constant 0 : index
    %213 = vector.load %arg12[%212, %c0_51] : memref<64x32xf32, #tpu.memory_space<vmem>>, vector<8x32xf32>
    tpu.vector_store %arg12[%212, %c0_51], %211 {strides = array<i32>} : memref<64x32xf32, #tpu.memory_space<vmem>>, vector<8x32xf32>,
    %c6_i32 = arith.constant 6 : i32
    %c8_i32_52 = arith.constant 8 : i32
    %214 = arith.muli %c6_i32, %c8_i32_52 : i32
    %215 = tpu.assume_multiple %214, 8 : i32
    %216 = arith.index_cast %215 : i32 to index
    %c0_53 = arith.constant 0 : index
    %217 = vector.load %arg11[%216, %c0_53] : memref<64x128xf32, #tpu.memory_space<vmem>>, vector<8x128xf32>
    %218 = arith.truncf %211 : vector<8x32xf32> to vector<8x32xbf16>
    %cst_54 = arith.constant dense<0.000000e+00> : vector<8x128xf32>
    %219 = tpu.matmul %218, %2, %cst_54 {dimension_numbers = #tpu.dot_dimension_numbers<[1], [0], [0], [1], [0, 0, 1, 1], [], []>} : vector<8x32xbf16>, vector<32x128xbf16>, vector<8x128xf32> -> vector<8x128xf32>
    %220 = arith.addf %217, %219 : vector<8x128xf32>
    %221 = vector.extract_strided_slice %220 {offsets = [0, 0], sizes = [8, 32], strides = [1, 1]} : vector<8x128xf32> to vector<8x32xf32>
    %222 = arith.negf %221 : vector<8x32xf32>
    %223 = math.exp %222 : vector<8x32xf32>
    %cst_55 = arith.constant 1.000000e+00 : f32
    %224 = vector.broadcast %cst_55 : f32 to vector<8x32xf32>
    %225 = arith.addf %224, %223 : vector<8x32xf32>
    %226 = arith.divf %224, %225 : vector<8x32xf32>
    %227 = vector.extract_strided_slice %220 {offsets = [0, 32], sizes = [8, 32], strides = [1, 1]} : vector<8x128xf32> to vector<8x32xf32>
    %228 = arith.negf %227 : vector<8x32xf32>
    %229 = math.exp %228 : vector<8x32xf32>
    %cst_56 = arith.constant 1.000000e+00 : f32
    %230 = vector.broadcast %cst_56 : f32 to vector<8x32xf32>
    %231 = arith.addf %230, %229 : vector<8x32xf32>
    %232 = arith.divf %230, %231 : vector<8x32xf32>
    %233 = vector.extract_strided_slice %220 {offsets = [0, 64], sizes = [8, 32], strides = [1, 1]} : vector<8x128xf32> to vector<8x32xf32>
    %234 = math.tanh %233 : vector<8x32xf32>
    %235 = vector.extract_strided_slice %220 {offsets = [0, 96], sizes = [8, 32], strides = [1, 1]} : vector<8x128xf32> to vector<8x32xf32>
    %236 = arith.negf %235 : vector<8x32xf32>
    %237 = math.exp %236 : vector<8x32xf32>
    %cst_57 = arith.constant 1.000000e+00 : f32
    %238 = vector.broadcast %cst_57 : f32 to vector<8x32xf32>
    %239 = arith.addf %238, %237 : vector<8x32xf32>
    %240 = arith.divf %238, %239 : vector<8x32xf32>
    %241 = arith.mulf %232, %209 : vector<8x32xf32>
    %242 = arith.mulf %226, %234 : vector<8x32xf32>
    %243 = arith.addf %241, %242 : vector<8x32xf32>
    %244 = math.tanh %243 : vector<8x32xf32>
    %245 = arith.mulf %240, %244 : vector<8x32xf32>
    %246 = arith.index_cast %215 : i32 to index
    %c0_58 = arith.constant 0 : index
    %247 = vector.load %arg12[%246, %c0_58] : memref<64x32xf32, #tpu.memory_space<vmem>>, vector<8x32xf32>
    tpu.vector_store %arg12[%246, %c0_58], %245 {strides = array<i32>} : memref<64x32xf32, #tpu.memory_space<vmem>>, vector<8x32xf32>,
    %c7_i32 = arith.constant 7 : i32
    %c8_i32_59 = arith.constant 8 : i32
    %248 = arith.muli %c7_i32, %c8_i32_59 : i32
    %249 = tpu.assume_multiple %248, 8 : i32
    %250 = arith.index_cast %249 : i32 to index
    %c0_60 = arith.constant 0 : index
    %251 = vector.load %arg11[%250, %c0_60] : memref<64x128xf32, #tpu.memory_space<vmem>>, vector<8x128xf32>
    %252 = arith.truncf %245 : vector<8x32xf32> to vector<8x32xbf16>
    %cst_61 = arith.constant dense<0.000000e+00> : vector<8x128xf32>
    %253 = tpu.matmul %252, %2, %cst_61 {dimension_numbers = #tpu.dot_dimension_numbers<[1], [0], [0], [1], [0, 0, 1, 1], [], []>} : vector<8x32xbf16>, vector<32x128xbf16>, vector<8x128xf32> -> vector<8x128xf32>
    %254 = arith.addf %251, %253 : vector<8x128xf32>
    %255 = vector.extract_strided_slice %254 {offsets = [0, 0], sizes = [8, 32], strides = [1, 1]} : vector<8x128xf32> to vector<8x32xf32>
    %256 = arith.negf %255 : vector<8x32xf32>
    %257 = math.exp %256 : vector<8x32xf32>
    %cst_62 = arith.constant 1.000000e+00 : f32
    %258 = vector.broadcast %cst_62 : f32 to vector<8x32xf32>
    %259 = arith.addf %258, %257 : vector<8x32xf32>
    %260 = arith.divf %258, %259 : vector<8x32xf32>
    %261 = vector.extract_strided_slice %254 {offsets = [0, 32], sizes = [8, 32], strides = [1, 1]} : vector<8x128xf32> to vector<8x32xf32>
    %262 = arith.negf %261 : vector<8x32xf32>
    %263 = math.exp %262 : vector<8x32xf32>
    %cst_63 = arith.constant 1.000000e+00 : f32
    %264 = vector.broadcast %cst_63 : f32 to vector<8x32xf32>
    %265 = arith.addf %264, %263 : vector<8x32xf32>
    %266 = arith.divf %264, %265 : vector<8x32xf32>
    %267 = vector.extract_strided_slice %254 {offsets = [0, 64], sizes = [8, 32], strides = [1, 1]} : vector<8x128xf32> to vector<8x32xf32>
    %268 = math.tanh %267 : vector<8x32xf32>
    %269 = vector.extract_strided_slice %254 {offsets = [0, 96], sizes = [8, 32], strides = [1, 1]} : vector<8x128xf32> to vector<8x32xf32>
    %270 = arith.negf %269 : vector<8x32xf32>
    %271 = math.exp %270 : vector<8x32xf32>
    %cst_64 = arith.constant 1.000000e+00 : f32
    %272 = vector.broadcast %cst_64 : f32 to vector<8x32xf32>
    %273 = arith.addf %272, %271 : vector<8x32xf32>
    %274 = arith.divf %272, %273 : vector<8x32xf32>
    %275 = arith.mulf %266, %243 : vector<8x32xf32>
    %276 = arith.mulf %260, %268 : vector<8x32xf32>
    %277 = arith.addf %275, %276 : vector<8x32xf32>
    %278 = math.tanh %277 : vector<8x32xf32>
    %279 = arith.mulf %274, %278 : vector<8x32xf32>
    %280 = arith.index_cast %249 : i32 to index
    %c0_65 = arith.constant 0 : index
    %281 = vector.load %arg12[%280, %c0_65] : memref<64x32xf32, #tpu.memory_space<vmem>>, vector<8x32xf32>
    tpu.vector_store %arg12[%280, %c0_65], %279 {strides = array<i32>} : memref<64x32xf32, #tpu.memory_space<vmem>>, vector<8x32xf32>,
    %c8_i32_66 = arith.constant 8 : i32
    %c0_67 = arith.constant 0 : index
    %c0_68 = arith.constant 0 : index
    %282 = vector.load %arg12[%c0_67, %c0_68] : memref<64x32xf32, #tpu.memory_space<vmem>>, vector<64x32xf32>
    %283 = arith.truncf %282 : vector<64x32xf32> to vector<64x32xbf16>
    %c0_69 = arith.constant 0 : index
    %c0_70 = arith.constant 0 : index
    %284 = vector.load %arg5[%c0_69, %c0_70] : memref<32x128xbf16, #tpu.memory_space<vmem>>, vector<32x128xbf16>
    %c0_71 = arith.constant 0 : index
    %c0_72 = arith.constant 0 : index
    %285 = vector.load %arg6[%c0_71, %c0_72] : memref<32x128xbf16, #tpu.memory_space<vmem>>, vector<32x128xbf16>
    %c0_73 = arith.constant 0 : index
    %c0_74 = arith.constant 0 : index
    %286 = vector.load %arg7[%c0_73, %c0_74] : memref<1x128xf32, #tpu.memory_space<vmem>>, vector<1x128xf32>
    %cst_75 = arith.constant dense<0.000000e+00> : vector<64x128xf32>
    %287 = tpu.matmul %283, %284, %cst_75 {dimension_numbers = #tpu.dot_dimension_numbers<[1], [0], [0], [1], [0, 0, 1, 1], [], []>} : vector<64x32xbf16>, vector<32x128xbf16>, vector<64x128xf32> -> vector<64x128xf32>
    %288 = vector.broadcast %286 : vector<1x128xf32> to vector<64x128xf32>
    %289 = arith.addf %287, %288 : vector<64x128xf32>
    %c0_76 = arith.constant 0 : index
    %c0_77 = arith.constant 0 : index
    %290 = vector.load %arg11[%c0_76, %c0_77] : memref<64x128xf32, #tpu.memory_space<vmem>>, vector<64x128xf32>
    tpu.vector_store %arg11[%c0_76, %c0_77], %289 {strides = array<i32>} : memref<64x128xf32, #tpu.memory_space<vmem>>, vector<64x128xf32>,
    %cst_78 = arith.constant 0.000000e+00 : f32
    %291 = vector.broadcast %cst_78 : f32 to vector<8x32xf32>
    %cst_79 = arith.constant 0.000000e+00 : f32
    %292 = vector.broadcast %cst_79 : f32 to vector<8x32xf32>
    %c0_i32_80 = arith.constant 0 : i32
    %c8_i32_81 = arith.constant 8 : i32
    %293 = arith.muli %c0_i32_80, %c8_i32_81 : i32
    %294 = tpu.assume_multiple %293, 8 : i32
    %295 = arith.index_cast %294 : i32 to index
    %c0_82 = arith.constant 0 : index
    %296 = vector.load %arg11[%295, %c0_82] : memref<64x128xf32, #tpu.memory_space<vmem>>, vector<8x128xf32>
    %297 = arith.truncf %291 : vector<8x32xf32> to vector<8x32xbf16>
    %cst_83 = arith.constant dense<0.000000e+00> : vector<8x128xf32>
    %298 = tpu.matmul %297, %285, %cst_83 {dimension_numbers = #tpu.dot_dimension_numbers<[1], [0], [0], [1], [0, 0, 1, 1], [], []>} : vector<8x32xbf16>, vector<32x128xbf16>, vector<8x128xf32> -> vector<8x128xf32>
    %299 = arith.addf %296, %298 : vector<8x128xf32>
    %300 = vector.extract_strided_slice %299 {offsets = [0, 0], sizes = [8, 32], strides = [1, 1]} : vector<8x128xf32> to vector<8x32xf32>
    %301 = arith.negf %300 : vector<8x32xf32>
    %302 = math.exp %301 : vector<8x32xf32>
    %cst_84 = arith.constant 1.000000e+00 : f32
    %303 = vector.broadcast %cst_84 : f32 to vector<8x32xf32>
    %304 = arith.addf %303, %302 : vector<8x32xf32>
    %305 = arith.divf %303, %304 : vector<8x32xf32>
    %306 = vector.extract_strided_slice %299 {offsets = [0, 32], sizes = [8, 32], strides = [1, 1]} : vector<8x128xf32> to vector<8x32xf32>
    %307 = arith.negf %306 : vector<8x32xf32>
    %308 = math.exp %307 : vector<8x32xf32>
    %cst_85 = arith.constant 1.000000e+00 : f32
    %309 = vector.broadcast %cst_85 : f32 to vector<8x32xf32>
    %310 = arith.addf %309, %308 : vector<8x32xf32>
    %311 = arith.divf %309, %310 : vector<8x32xf32>
    %312 = vector.extract_strided_slice %299 {offsets = [0, 64], sizes = [8, 32], strides = [1, 1]} : vector<8x128xf32> to vector<8x32xf32>
    %313 = math.tanh %312 : vector<8x32xf32>
    %314 = vector.extract_strided_slice %299 {offsets = [0, 96], sizes = [8, 32], strides = [1, 1]} : vector<8x128xf32> to vector<8x32xf32>
    %315 = arith.negf %314 : vector<8x32xf32>
    %316 = math.exp %315 : vector<8x32xf32>
    %cst_86 = arith.constant 1.000000e+00 : f32
    %317 = vector.broadcast %cst_86 : f32 to vector<8x32xf32>
    %318 = arith.addf %317, %316 : vector<8x32xf32>
    %319 = arith.divf %317, %318 : vector<8x32xf32>
    %320 = arith.mulf %311, %292 : vector<8x32xf32>
    %321 = arith.mulf %305, %313 : vector<8x32xf32>
    %322 = arith.addf %320, %321 : vector<8x32xf32>
    %323 = math.tanh %322 : vector<8x32xf32>
    %324 = arith.mulf %319, %323 : vector<8x32xf32>
    %c1_i32_87 = arith.constant 1 : i32
    %c8_i32_88 = arith.constant 8 : i32
    %325 = arith.muli %c1_i32_87, %c8_i32_88 : i32
    %326 = tpu.assume_multiple %325, 8 : i32
    %327 = arith.index_cast %326 : i32 to index
    %c0_89 = arith.constant 0 : index
    %328 = vector.load %arg11[%327, %c0_89] : memref<64x128xf32, #tpu.memory_space<vmem>>, vector<8x128xf32>
    %329 = arith.truncf %324 : vector<8x32xf32> to vector<8x32xbf16>
    %cst_90 = arith.constant dense<0.000000e+00> : vector<8x128xf32>
    %330 = tpu.matmul %329, %285, %cst_90 {dimension_numbers = #tpu.dot_dimension_numbers<[1], [0], [0], [1], [0, 0, 1, 1], [], []>} : vector<8x32xbf16>, vector<32x128xbf16>, vector<8x128xf32> -> vector<8x128xf32>
    %331 = arith.addf %328, %330 : vector<8x128xf32>
    %332 = vector.extract_strided_slice %331 {offsets = [0, 0], sizes = [8, 32], strides = [1, 1]} : vector<8x128xf32> to vector<8x32xf32>
    %333 = arith.negf %332 : vector<8x32xf32>
    %334 = math.exp %333 : vector<8x32xf32>
    %cst_91 = arith.constant 1.000000e+00 : f32
    %335 = vector.broadcast %cst_91 : f32 to vector<8x32xf32>
    %336 = arith.addf %335, %334 : vector<8x32xf32>
    %337 = arith.divf %335, %336 : vector<8x32xf32>
    %338 = vector.extract_strided_slice %331 {offsets = [0, 32], sizes = [8, 32], strides = [1, 1]} : vector<8x128xf32> to vector<8x32xf32>
    %339 = arith.negf %338 : vector<8x32xf32>
    %340 = math.exp %339 : vector<8x32xf32>
    %cst_92 = arith.constant 1.000000e+00 : f32
    %341 = vector.broadcast %cst_92 : f32 to vector<8x32xf32>
    %342 = arith.addf %341, %340 : vector<8x32xf32>
    %343 = arith.divf %341, %342 : vector<8x32xf32>
    %344 = vector.extract_strided_slice %331 {offsets = [0, 64], sizes = [8, 32], strides = [1, 1]} : vector<8x128xf32> to vector<8x32xf32>
    %345 = math.tanh %344 : vector<8x32xf32>
    %346 = vector.extract_strided_slice %331 {offsets = [0, 96], sizes = [8, 32], strides = [1, 1]} : vector<8x128xf32> to vector<8x32xf32>
    %347 = arith.negf %346 : vector<8x32xf32>
    %348 = math.exp %347 : vector<8x32xf32>
    %cst_93 = arith.constant 1.000000e+00 : f32
    %349 = vector.broadcast %cst_93 : f32 to vector<8x32xf32>
    %350 = arith.addf %349, %348 : vector<8x32xf32>
    %351 = arith.divf %349, %350 : vector<8x32xf32>
    %352 = arith.mulf %343, %322 : vector<8x32xf32>
    %353 = arith.mulf %337, %345 : vector<8x32xf32>
    %354 = arith.addf %352, %353 : vector<8x32xf32>
    %355 = math.tanh %354 : vector<8x32xf32>
    %356 = arith.mulf %351, %355 : vector<8x32xf32>
    %c2_i32_94 = arith.constant 2 : i32
    %c8_i32_95 = arith.constant 8 : i32
    %357 = arith.muli %c2_i32_94, %c8_i32_95 : i32
    %358 = tpu.assume_multiple %357, 8 : i32
    %359 = arith.index_cast %358 : i32 to index
    %c0_96 = arith.constant 0 : index
    %360 = vector.load %arg11[%359, %c0_96] : memref<64x128xf32, #tpu.memory_space<vmem>>, vector<8x128xf32>
    %361 = arith.truncf %356 : vector<8x32xf32> to vector<8x32xbf16>
    %cst_97 = arith.constant dense<0.000000e+00> : vector<8x128xf32>
    %362 = tpu.matmul %361, %285, %cst_97 {dimension_numbers = #tpu.dot_dimension_numbers<[1], [0], [0], [1], [0, 0, 1, 1], [], []>} : vector<8x32xbf16>, vector<32x128xbf16>, vector<8x128xf32> -> vector<8x128xf32>
    %363 = arith.addf %360, %362 : vector<8x128xf32>
    %364 = vector.extract_strided_slice %363 {offsets = [0, 0], sizes = [8, 32], strides = [1, 1]} : vector<8x128xf32> to vector<8x32xf32>
    %365 = arith.negf %364 : vector<8x32xf32>
    %366 = math.exp %365 : vector<8x32xf32>
    %cst_98 = arith.constant 1.000000e+00 : f32
    %367 = vector.broadcast %cst_98 : f32 to vector<8x32xf32>
    %368 = arith.addf %367, %366 : vector<8x32xf32>
    %369 = arith.divf %367, %368 : vector<8x32xf32>
    %370 = vector.extract_strided_slice %363 {offsets = [0, 32], sizes = [8, 32], strides = [1, 1]} : vector<8x128xf32> to vector<8x32xf32>
    %371 = arith.negf %370 : vector<8x32xf32>
    %372 = math.exp %371 : vector<8x32xf32>
    %cst_99 = arith.constant 1.000000e+00 : f32
    %373 = vector.broadcast %cst_99 : f32 to vector<8x32xf32>
    %374 = arith.addf %373, %372 : vector<8x32xf32>
    %375 = arith.divf %373, %374 : vector<8x32xf32>
    %376 = vector.extract_strided_slice %363 {offsets = [0, 64], sizes = [8, 32], strides = [1, 1]} : vector<8x128xf32> to vector<8x32xf32>
    %377 = math.tanh %376 : vector<8x32xf32>
    %378 = vector.extract_strided_slice %363 {offsets = [0, 96], sizes = [8, 32], strides = [1, 1]} : vector<8x128xf32> to vector<8x32xf32>
    %379 = arith.negf %378 : vector<8x32xf32>
    %380 = math.exp %379 : vector<8x32xf32>
    %cst_100 = arith.constant 1.000000e+00 : f32
    %381 = vector.broadcast %cst_100 : f32 to vector<8x32xf32>
    %382 = arith.addf %381, %380 : vector<8x32xf32>
    %383 = arith.divf %381, %382 : vector<8x32xf32>
    %384 = arith.mulf %375, %354 : vector<8x32xf32>
    %385 = arith.mulf %369, %377 : vector<8x32xf32>
    %386 = arith.addf %384, %385 : vector<8x32xf32>
    %387 = math.tanh %386 : vector<8x32xf32>
    %388 = arith.mulf %383, %387 : vector<8x32xf32>
    %c3_i32_101 = arith.constant 3 : i32
    %c8_i32_102 = arith.constant 8 : i32
    %389 = arith.muli %c3_i32_101, %c8_i32_102 : i32
    %390 = tpu.assume_multiple %389, 8 : i32
    %391 = arith.index_cast %390 : i32 to index
    %c0_103 = arith.constant 0 : index
    %392 = vector.load %arg11[%391, %c0_103] : memref<64x128xf32, #tpu.memory_space<vmem>>, vector<8x128xf32>
    %393 = arith.truncf %388 : vector<8x32xf32> to vector<8x32xbf16>
    %cst_104 = arith.constant dense<0.000000e+00> : vector<8x128xf32>
    %394 = tpu.matmul %393, %285, %cst_104 {dimension_numbers = #tpu.dot_dimension_numbers<[1], [0], [0], [1], [0, 0, 1, 1], [], []>} : vector<8x32xbf16>, vector<32x128xbf16>, vector<8x128xf32> -> vector<8x128xf32>
    %395 = arith.addf %392, %394 : vector<8x128xf32>
    %396 = vector.extract_strided_slice %395 {offsets = [0, 0], sizes = [8, 32], strides = [1, 1]} : vector<8x128xf32> to vector<8x32xf32>
    %397 = arith.negf %396 : vector<8x32xf32>
    %398 = math.exp %397 : vector<8x32xf32>
    %cst_105 = arith.constant 1.000000e+00 : f32
    %399 = vector.broadcast %cst_105 : f32 to vector<8x32xf32>
    %400 = arith.addf %399, %398 : vector<8x32xf32>
    %401 = arith.divf %399, %400 : vector<8x32xf32>
    %402 = vector.extract_strided_slice %395 {offsets = [0, 32], sizes = [8, 32], strides = [1, 1]} : vector<8x128xf32> to vector<8x32xf32>
    %403 = arith.negf %402 : vector<8x32xf32>
    %404 = math.exp %403 : vector<8x32xf32>
    %cst_106 = arith.constant 1.000000e+00 : f32
    %405 = vector.broadcast %cst_106 : f32 to vector<8x32xf32>
    %406 = arith.addf %405, %404 : vector<8x32xf32>
    %407 = arith.divf %405, %406 : vector<8x32xf32>
    %408 = vector.extract_strided_slice %395 {offsets = [0, 64], sizes = [8, 32], strides = [1, 1]} : vector<8x128xf32> to vector<8x32xf32>
    %409 = math.tanh %408 : vector<8x32xf32>
    %410 = vector.extract_strided_slice %395 {offsets = [0, 96], sizes = [8, 32], strides = [1, 1]} : vector<8x128xf32> to vector<8x32xf32>
    %411 = arith.negf %410 : vector<8x32xf32>
    %412 = math.exp %411 : vector<8x32xf32>
    %cst_107 = arith.constant 1.000000e+00 : f32
    %413 = vector.broadcast %cst_107 : f32 to vector<8x32xf32>
    %414 = arith.addf %413, %412 : vector<8x32xf32>
    %415 = arith.divf %413, %414 : vector<8x32xf32>
    %416 = arith.mulf %407, %386 : vector<8x32xf32>
    %417 = arith.mulf %401, %409 : vector<8x32xf32>
    %418 = arith.addf %416, %417 : vector<8x32xf32>
    %419 = math.tanh %418 : vector<8x32xf32>
    %420 = arith.mulf %415, %419 : vector<8x32xf32>
    %c4_i32_108 = arith.constant 4 : i32
    %c8_i32_109 = arith.constant 8 : i32
    %421 = arith.muli %c4_i32_108, %c8_i32_109 : i32
    %422 = tpu.assume_multiple %421, 8 : i32
    %423 = arith.index_cast %422 : i32 to index
    %c0_110 = arith.constant 0 : index
    %424 = vector.load %arg11[%423, %c0_110] : memref<64x128xf32, #tpu.memory_space<vmem>>, vector<8x128xf32>
    %425 = arith.truncf %420 : vector<8x32xf32> to vector<8x32xbf16>
    %cst_111 = arith.constant dense<0.000000e+00> : vector<8x128xf32>
    %426 = tpu.matmul %425, %285, %cst_111 {dimension_numbers = #tpu.dot_dimension_numbers<[1], [0], [0], [1], [0, 0, 1, 1], [], []>} : vector<8x32xbf16>, vector<32x128xbf16>, vector<8x128xf32> -> vector<8x128xf32>
    %427 = arith.addf %424, %426 : vector<8x128xf32>
    %428 = vector.extract_strided_slice %427 {offsets = [0, 0], sizes = [8, 32], strides = [1, 1]} : vector<8x128xf32> to vector<8x32xf32>
    %429 = arith.negf %428 : vector<8x32xf32>
    %430 = math.exp %429 : vector<8x32xf32>
    %cst_112 = arith.constant 1.000000e+00 : f32
    %431 = vector.broadcast %cst_112 : f32 to vector<8x32xf32>
    %432 = arith.addf %431, %430 : vector<8x32xf32>
    %433 = arith.divf %431, %432 : vector<8x32xf32>
    %434 = vector.extract_strided_slice %427 {offsets = [0, 32], sizes = [8, 32], strides = [1, 1]} : vector<8x128xf32> to vector<8x32xf32>
    %435 = arith.negf %434 : vector<8x32xf32>
    %436 = math.exp %435 : vector<8x32xf32>
    %cst_113 = arith.constant 1.000000e+00 : f32
    %437 = vector.broadcast %cst_113 : f32 to vector<8x32xf32>
    %438 = arith.addf %437, %436 : vector<8x32xf32>
    %439 = arith.divf %437, %438 : vector<8x32xf32>
    %440 = vector.extract_strided_slice %427 {offsets = [0, 64], sizes = [8, 32], strides = [1, 1]} : vector<8x128xf32> to vector<8x32xf32>
    %441 = math.tanh %440 : vector<8x32xf32>
    %442 = vector.extract_strided_slice %427 {offsets = [0, 96], sizes = [8, 32], strides = [1, 1]} : vector<8x128xf32> to vector<8x32xf32>
    %443 = arith.negf %442 : vector<8x32xf32>
    %444 = math.exp %443 : vector<8x32xf32>
    %cst_114 = arith.constant 1.000000e+00 : f32
    %445 = vector.broadcast %cst_114 : f32 to vector<8x32xf32>
    %446 = arith.addf %445, %444 : vector<8x32xf32>
    %447 = arith.divf %445, %446 : vector<8x32xf32>
    %448 = arith.mulf %439, %418 : vector<8x32xf32>
    %449 = arith.mulf %433, %441 : vector<8x32xf32>
    %450 = arith.addf %448, %449 : vector<8x32xf32>
    %451 = math.tanh %450 : vector<8x32xf32>
    %452 = arith.mulf %447, %451 : vector<8x32xf32>
    %c5_i32_115 = arith.constant 5 : i32
    %c8_i32_116 = arith.constant 8 : i32
    %453 = arith.muli %c5_i32_115, %c8_i32_116 : i32
    %454 = tpu.assume_multiple %453, 8 : i32
    %455 = arith.index_cast %454 : i32 to index
    %c0_117 = arith.constant 0 : index
    %456 = vector.load %arg11[%455, %c0_117] : memref<64x128xf32, #tpu.memory_space<vmem>>, vector<8x128xf32>
    %457 = arith.truncf %452 : vector<8x32xf32> to vector<8x32xbf16>
    %cst_118 = arith.constant dense<0.000000e+00> : vector<8x128xf32>
    %458 = tpu.matmul %457, %285, %cst_118 {dimension_numbers = #tpu.dot_dimension_numbers<[1], [0], [0], [1], [0, 0, 1, 1], [], []>} : vector<8x32xbf16>, vector<32x128xbf16>, vector<8x128xf32> -> vector<8x128xf32>
    %459 = arith.addf %456, %458 : vector<8x128xf32>
    %460 = vector.extract_strided_slice %459 {offsets = [0, 0], sizes = [8, 32], strides = [1, 1]} : vector<8x128xf32> to vector<8x32xf32>
    %461 = arith.negf %460 : vector<8x32xf32>
    %462 = math.exp %461 : vector<8x32xf32>
    %cst_119 = arith.constant 1.000000e+00 : f32
    %463 = vector.broadcast %cst_119 : f32 to vector<8x32xf32>
    %464 = arith.addf %463, %462 : vector<8x32xf32>
    %465 = arith.divf %463, %464 : vector<8x32xf32>
    %466 = vector.extract_strided_slice %459 {offsets = [0, 32], sizes = [8, 32], strides = [1, 1]} : vector<8x128xf32> to vector<8x32xf32>
    %467 = arith.negf %466 : vector<8x32xf32>
    %468 = math.exp %467 : vector<8x32xf32>
    %cst_120 = arith.constant 1.000000e+00 : f32
    %469 = vector.broadcast %cst_120 : f32 to vector<8x32xf32>
    %470 = arith.addf %469, %468 : vector<8x32xf32>
    %471 = arith.divf %469, %470 : vector<8x32xf32>
    %472 = vector.extract_strided_slice %459 {offsets = [0, 64], sizes = [8, 32], strides = [1, 1]} : vector<8x128xf32> to vector<8x32xf32>
    %473 = math.tanh %472 : vector<8x32xf32>
    %474 = vector.extract_strided_slice %459 {offsets = [0, 96], sizes = [8, 32], strides = [1, 1]} : vector<8x128xf32> to vector<8x32xf32>
    %475 = arith.negf %474 : vector<8x32xf32>
    %476 = math.exp %475 : vector<8x32xf32>
    %cst_121 = arith.constant 1.000000e+00 : f32
    %477 = vector.broadcast %cst_121 : f32 to vector<8x32xf32>
    %478 = arith.addf %477, %476 : vector<8x32xf32>
    %479 = arith.divf %477, %478 : vector<8x32xf32>
    %480 = arith.mulf %471, %450 : vector<8x32xf32>
    %481 = arith.mulf %465, %473 : vector<8x32xf32>
    %482 = arith.addf %480, %481 : vector<8x32xf32>
    %483 = math.tanh %482 : vector<8x32xf32>
    %484 = arith.mulf %479, %483 : vector<8x32xf32>
    %c6_i32_122 = arith.constant 6 : i32
    %c8_i32_123 = arith.constant 8 : i32
    %485 = arith.muli %c6_i32_122, %c8_i32_123 : i32
    %486 = tpu.assume_multiple %485, 8 : i32
    %487 = arith.index_cast %486 : i32 to index
    %c0_124 = arith.constant 0 : index
    %488 = vector.load %arg11[%487, %c0_124] : memref<64x128xf32, #tpu.memory_space<vmem>>, vector<8x128xf32>
    %489 = arith.truncf %484 : vector<8x32xf32> to vector<8x32xbf16>
    %cst_125 = arith.constant dense<0.000000e+00> : vector<8x128xf32>
    %490 = tpu.matmul %489, %285, %cst_125 {dimension_numbers = #tpu.dot_dimension_numbers<[1], [0], [0], [1], [0, 0, 1, 1], [], []>} : vector<8x32xbf16>, vector<32x128xbf16>, vector<8x128xf32> -> vector<8x128xf32>
    %491 = arith.addf %488, %490 : vector<8x128xf32>
    %492 = vector.extract_strided_slice %491 {offsets = [0, 0], sizes = [8, 32], strides = [1, 1]} : vector<8x128xf32> to vector<8x32xf32>
    %493 = arith.negf %492 : vector<8x32xf32>
    %494 = math.exp %493 : vector<8x32xf32>
    %cst_126 = arith.constant 1.000000e+00 : f32
    %495 = vector.broadcast %cst_126 : f32 to vector<8x32xf32>
    %496 = arith.addf %495, %494 : vector<8x32xf32>
    %497 = arith.divf %495, %496 : vector<8x32xf32>
    %498 = vector.extract_strided_slice %491 {offsets = [0, 32], sizes = [8, 32], strides = [1, 1]} : vector<8x128xf32> to vector<8x32xf32>
    %499 = arith.negf %498 : vector<8x32xf32>
    %500 = math.exp %499 : vector<8x32xf32>
    %cst_127 = arith.constant 1.000000e+00 : f32
    %501 = vector.broadcast %cst_127 : f32 to vector<8x32xf32>
    %502 = arith.addf %501, %500 : vector<8x32xf32>
    %503 = arith.divf %501, %502 : vector<8x32xf32>
    %504 = vector.extract_strided_slice %491 {offsets = [0, 64], sizes = [8, 32], strides = [1, 1]} : vector<8x128xf32> to vector<8x32xf32>
    %505 = math.tanh %504 : vector<8x32xf32>
    %506 = vector.extract_strided_slice %491 {offsets = [0, 96], sizes = [8, 32], strides = [1, 1]} : vector<8x128xf32> to vector<8x32xf32>
    %507 = arith.negf %506 : vector<8x32xf32>
    %508 = math.exp %507 : vector<8x32xf32>
    %cst_128 = arith.constant 1.000000e+00 : f32
    %509 = vector.broadcast %cst_128 : f32 to vector<8x32xf32>
    %510 = arith.addf %509, %508 : vector<8x32xf32>
    %511 = arith.divf %509, %510 : vector<8x32xf32>
    %512 = arith.mulf %503, %482 : vector<8x32xf32>
    %513 = arith.mulf %497, %505 : vector<8x32xf32>
    %514 = arith.addf %512, %513 : vector<8x32xf32>
    %515 = math.tanh %514 : vector<8x32xf32>
    %516 = arith.mulf %511, %515 : vector<8x32xf32>
    %c7_i32_129 = arith.constant 7 : i32
    %c8_i32_130 = arith.constant 8 : i32
    %517 = arith.muli %c7_i32_129, %c8_i32_130 : i32
    %518 = tpu.assume_multiple %517, 8 : i32
    %519 = arith.index_cast %518 : i32 to index
    %c0_131 = arith.constant 0 : index
    %520 = vector.load %arg11[%519, %c0_131] : memref<64x128xf32, #tpu.memory_space<vmem>>, vector<8x128xf32>
    %521 = arith.truncf %516 : vector<8x32xf32> to vector<8x32xbf16>
    %cst_132 = arith.constant dense<0.000000e+00> : vector<8x128xf32>
    %522 = tpu.matmul %521, %285, %cst_132 {dimension_numbers = #tpu.dot_dimension_numbers<[1], [0], [0], [1], [0, 0, 1, 1], [], []>} : vector<8x32xbf16>, vector<32x128xbf16>, vector<8x128xf32> -> vector<8x128xf32>
    %523 = arith.addf %520, %522 : vector<8x128xf32>
    %524 = vector.extract_strided_slice %523 {offsets = [0, 0], sizes = [8, 32], strides = [1, 1]} : vector<8x128xf32> to vector<8x32xf32>
    %525 = arith.negf %524 : vector<8x32xf32>
    %526 = math.exp %525 : vector<8x32xf32>
    %cst_133 = arith.constant 1.000000e+00 : f32
    %527 = vector.broadcast %cst_133 : f32 to vector<8x32xf32>
    %528 = arith.addf %527, %526 : vector<8x32xf32>
    %529 = arith.divf %527, %528 : vector<8x32xf32>
    %530 = vector.extract_strided_slice %523 {offsets = [0, 32], sizes = [8, 32], strides = [1, 1]} : vector<8x128xf32> to vector<8x32xf32>
    %531 = arith.negf %530 : vector<8x32xf32>
    %532 = math.exp %531 : vector<8x32xf32>
    %cst_134 = arith.constant 1.000000e+00 : f32
    %533 = vector.broadcast %cst_134 : f32 to vector<8x32xf32>
    %534 = arith.addf %533, %532 : vector<8x32xf32>
    %535 = arith.divf %533, %534 : vector<8x32xf32>
    %536 = vector.extract_strided_slice %523 {offsets = [0, 64], sizes = [8, 32], strides = [1, 1]} : vector<8x128xf32> to vector<8x32xf32>
    %537 = math.tanh %536 : vector<8x32xf32>
    %538 = vector.extract_strided_slice %523 {offsets = [0, 96], sizes = [8, 32], strides = [1, 1]} : vector<8x128xf32> to vector<8x32xf32>
    %539 = arith.negf %538 : vector<8x32xf32>
    %540 = math.exp %539 : vector<8x32xf32>
    %cst_135 = arith.constant 1.000000e+00 : f32
    %541 = vector.broadcast %cst_135 : f32 to vector<8x32xf32>
    %542 = arith.addf %541, %540 : vector<8x32xf32>
    %543 = arith.divf %541, %542 : vector<8x32xf32>
    %544 = arith.mulf %535, %514 : vector<8x32xf32>
    %545 = arith.mulf %529, %537 : vector<8x32xf32>
    %546 = arith.addf %544, %545 : vector<8x32xf32>
    %547 = math.tanh %546 : vector<8x32xf32>
    %548 = arith.mulf %543, %547 : vector<8x32xf32>
    %c8_i32_136 = arith.constant 8 : i32
    %c0_137 = arith.constant 0 : index
    %c0_138 = arith.constant 0 : index
    %549 = vector.load %arg8[%c0_137, %c0_138] : memref<32x5xf32, #tpu.memory_space<vmem>>, vector<32x5xf32>
    %cst_139 = arith.constant dense<0.000000e+00> : vector<8x5xf32>
    %550 = tpu.matmul %548, %549, %cst_139 {dimension_numbers = #tpu.dot_dimension_numbers<[1], [0], [0], [1], [0, 0, 1, 1], [], []>} : vector<8x32xf32>, vector<32x5xf32>, vector<8x5xf32> -> vector<8x5xf32>
    %c0_140 = arith.constant 0 : index
    %c0_141 = arith.constant 0 : index
    %551 = vector.load %arg9[%c0_140, %c0_141] : memref<1x5xf32, #tpu.memory_space<vmem>>, vector<1x5xf32>
    %552 = vector.broadcast %551 : vector<1x5xf32> to vector<8x5xf32>
    %553 = arith.addf %550, %552 : vector<8x5xf32>
    %554 = arith.negf %553 : vector<8x5xf32>
    %555 = math.exp %554 : vector<8x5xf32>
    %cst_142 = arith.constant 1.000000e+00 : f32
    %556 = vector.broadcast %cst_142 : f32 to vector<8x5xf32>
    %557 = arith.addf %556, %555 : vector<8x5xf32>
    %558 = arith.divf %556, %557 : vector<8x5xf32>
    %c0_143 = arith.constant 0 : index
    %c0_144 = arith.constant 0 : index
    %559 = vector.load %arg10[%c0_143, %c0_144] : memref<8x5xf32, #tpu.memory_space<vmem>>, vector<8x5xf32>
    tpu.vector_store %arg10[%c0_143, %c0_144], %558 {strides = array<i32>} : memref<8x5xf32, #tpu.memory_space<vmem>>, vector<8x5xf32>,
    return
  }
  func.func @transform_0(%arg0: i32) -> (i32, i32) {
    %c0_i32 = arith.constant 0 : i32
    %c0_i32_0 = arith.constant 0 : i32
    %c0_i32_1 = arith.constant 0 : i32
    return %c0_i32, %c0_i32_0 : i32, i32
  }
  func.func @transform_1(%arg0: i32) -> (i32, i32) {
    %c0_i32 = arith.constant 0 : i32
    %c0_i32_0 = arith.constant 0 : i32
    %c0_i32_1 = arith.constant 0 : i32
    return %c0_i32, %c0_i32_0 : i32, i32
  }
  func.func @transform_2(%arg0: i32) -> (i32, i32) {
    %c0_i32 = arith.constant 0 : i32
    %c0_i32_0 = arith.constant 0 : i32
    %c0_i32_1 = arith.constant 0 : i32
    return %c0_i32, %c0_i32_0 : i32, i32
  }
  func.func @transform_3(%arg0: i32) -> (i32, i32) {
    %c0_i32 = arith.constant 0 : i32
    %c0_i32_0 = arith.constant 0 : i32
    %c0_i32_1 = arith.constant 0 : i32
    return %c0_i32, %c0_i32_0 : i32, i32
  }
  func.func @transform_4(%arg0: i32) -> (i32, i32) {
    %c0_i32 = arith.constant 0 : i32
    %c0_i32_0 = arith.constant 0 : i32
    %c0_i32_1 = arith.constant 0 : i32
    return %c0_i32, %c0_i32_0 : i32, i32
  }
  func.func @transform_5(%arg0: i32) -> (i32, i32) {
    %c0_i32 = arith.constant 0 : i32
    %c0_i32_0 = arith.constant 0 : i32
    %c0_i32_1 = arith.constant 0 : i32
    return %c0_i32, %c0_i32_0 : i32, i32
  }
  func.func @transform_6(%arg0: i32) -> (i32, i32) {
    %c0_i32 = arith.constant 0 : i32
    %c0_i32_0 = arith.constant 0 : i32
    %c0_i32_1 = arith.constant 0 : i32
    return %c0_i32, %c0_i32_0 : i32, i32
  }
  func.func @transform_7(%arg0: i32) -> (i32, i32) {
    %c0_i32 = arith.constant 0 : i32
    %c0_i32_0 = arith.constant 0 : i32
    %c0_i32_1 = arith.constant 0 : i32
    return %c0_i32, %c0_i32_0 : i32, i32
  }
  func.func @transform_8(%arg0: i32) -> (i32, i32) {
    %c0_i32 = arith.constant 0 : i32
    %c0_i32_0 = arith.constant 0 : i32
    %c0_i32_1 = arith.constant 0 : i32
    return %c0_i32, %c0_i32_0 : i32, i32
  }
  func.func @transform_9(%arg0: i32) -> (i32, i32) {
    %c0_i32 = arith.constant 0 : i32
    %c0_i32_0 = arith.constant 0 : i32
    %c0_i32_1 = arith.constant 0 : i32
    return %c0_i32, %c0_i32_0 : i32, i32
  }
}

</mosaic_0001>

<llo_original>
// kernel: lstm_forward.1
$region0: #{lstm_forward.1}
  #allocation0 [shape = 'u32[]', space=smem, size = 0x4, offset = 0x4, fixed_abs, tag = 'smem constant byte address 0x4 - core index']
  #allocation1 [shape = 'u32[72,128]{1,0:T(1,128)}', space=vmem, size = 0x9000, scoped, tag = 'internal scratch']
  #allocation2 [shape = 'f32[64,128]{1,0:T(8,128)}', space=vmem, size = 0x8000, scoped, tag = 'scratch operand']
  #allocation3 [shape = 'f32[64,32]{1,0:T(8,128)}', space=vmem, size = 0x8000, scoped, tag = 'scratch operand']
  %s0 = inlined_call_operand.vmem [shape: bf16[64,64], index: 0, kind: input, shape index: {}]
  %s1 = inlined_call_operand.vmem [shape: bf16[64,128], index: 1, kind: input, shape index: {}]
  %s2 = inlined_call_operand.vmem [shape: bf16[32,128], index: 2, kind: input, shape index: {}]
  %s3 = inlined_call_operand.vmem [shape: f32[1,128], index: 3, kind: input, shape index: {}]
  %s4 = inlined_call_operand.vmem [shape: bf16[32,128], index: 4, kind: input, shape index: {}]
  %s5 = inlined_call_operand.vmem [shape: bf16[32,128], index: 5, kind: input, shape index: {}]
  %s6 = inlined_call_operand.vmem [shape: f32[1,128], index: 6, kind: input, shape index: {}]
  %s7 = inlined_call_operand.vmem [shape: f32[32,5], index: 7, kind: input, shape index: {}]
  %s8 = inlined_call_operand.vmem [shape: f32[1,5], index: 8, kind: input, shape index: {}]
  %s9 = inlined_call_operand.vmem [shape: f32[8,5], index: 9, kind: output, shape index: {}]
  %s10 = sld [smem:[#allocation0]]
  $region46: #{lstm_forward.1} parent=0
    _
  %s12 = ssub.s32 1, %s10
  %s13 = scalar_select 0, %s12, %s10
  // Predicated region
  $region2: #{lstm_forward.1} parent=0 // pred_check
    _
  $region3: #{lstm_forward.1} parent=0 // pred_check_branch
    %15 = sbr.rel (0) target = $region5
  $region4: #{lstm_forward.1} parent=0 // pred_region
    _
  $region5: #{lstm_forward.1} parent=0 // pred_fallthru
    _
  // Predicated region
  $region6: #{lstm_forward.1} parent=0 // pred_check
    _
  $region7: #{lstm_forward.1} parent=0 // pred_check_branch
    %17 = sbr.rel (0) target = $region9
  $region8: #{lstm_forward.1} parent=0 // pred_region
    _
  $region9: #{lstm_forward.1} parent=0 // pred_fallthru
    _
  // Predicated region
  $region10: #{lstm_forward.1} parent=0 // pred_check
    _
  $region11: #{lstm_forward.1} parent=0 // pred_check_branch
    %19 = sbr.rel (0) target = $region13
  $region12: #{lstm_forward.1} parent=0 // pred_region
    _
  $region13: #{lstm_forward.1} parent=0 // pred_fallthru
    _
  // Predicated region
  $region14: #{lstm_forward.1} parent=0 // pred_check
    _
  $region15: #{lstm_forward.1} parent=0 // pred_check_branch
    %21 = sbr.rel (0) target = $region17
  $region16: #{lstm_forward.1} parent=0 // pred_region
    _
  $region17: #{lstm_forward.1} parent=0 // pred_fallthru
    _
  // Predicated region
  $region18: #{lstm_forward.1} parent=0 // pred_check
    _
  $region19: #{lstm_forward.1} parent=0 // pred_check_branch
    %23 = sbr.rel (0) target = $region21
  $region20: #{lstm_forward.1} parent=0 // pred_region
    _
  $region21: #{lstm_forward.1} parent=0 // pred_fallthru
    _
  // Predicated region
  $region22: #{lstm_forward.1} parent=0 // pred_check
    _
  $region23: #{lstm_forward.1} parent=0 // pred_check_branch
    %25 = sbr.rel (0) target = $region25
  $region24: #{lstm_forward.1} parent=0 // pred_region
    _
  $region25: #{lstm_forward.1} parent=0 // pred_fallthru
    _
  // Predicated region
  $region26: #{lstm_forward.1} parent=0 // pred_check
    _
  $region27: #{lstm_forward.1} parent=0 // pred_check_branch
    %27 = sbr.rel (0) target = $region29
  $region28: #{lstm_forward.1} parent=0 // pred_region
    _
  $region29: #{lstm_forward.1} parent=0 // pred_fallthru
    _
  // Predicated region
  $region30: #{lstm_forward.1} parent=0 // pred_check
    _
  $region31: #{lstm_forward.1} parent=0 // pred_check_branch
    %29 = sbr.rel (0) target = $region33
  $region32: #{lstm_forward.1} parent=0 // pred_region
    _
  $region33: #{lstm_forward.1} parent=0 // pred_fallthru
    _
  // Predicated region
  $region34: #{lstm_forward.1} parent=0 // pred_check
    _
  $region35: #{lstm_forward.1} parent=0 // pred_check_branch
    %31 = sbr.rel (0) target = $region37
  $region36: #{lstm_forward.1} parent=0 // pred_region
    _
  $region37: #{lstm_forward.1} parent=0 // pred_fallthru
    _
  %v33 = vld [vmem:[%s0] sm:$0xf]
  %v34 = vld [vmem:[%s0 + $0x4] sm:$0xf]
  %v35 = vld [vmem:[%s0 + $0x8] sm:$0xf]
  %v36 = vld [vmem:[%s0 + $0xc] sm:$0xf]
  %v37 = vld [vmem:[%s0 + $0x10] sm:$0xf]
  %v38 = vld [vmem:[%s0 + $0x14] sm:$0xf]
  %v39 = vld [vmem:[%s0 + $0x18] sm:$0xf]
  %v40 = vld [vmem:[%s0 + $0x1c] sm:$0xf]
  %v41 = vld [vmem:[%s1] sm:$0xf]
  %v42 = vld [vmem:[%s1 + $0x4] sm:$0xf]
  %v43 = vld [vmem:[%s1 + $0x8] sm:$0xf]
  %v44 = vld [vmem:[%s1 + $0xc] sm:$0xf]
  %v45 = vld [vmem:[%s1 + $0x10] sm:$0xf]
  %v46 = vld [vmem:[%s1 + $0x14] sm:$0xf]
  %v47 = vld [vmem:[%s1 + $0x18] sm:$0xf]
  %v48 = vld [vmem:[%s1 + $0x1c] sm:$0xf]
  %v49 = vld [vmem:[%s2] sm:$0xf]
  %v50 = vld [vmem:[%s2 + $0x4] sm:$0xf]
  %v51 = vld [vmem:[%s2 + $0x8] sm:$0xf]
  %v52 = vld [vmem:[%s2 + $0xc] sm:$0xf]
  %v53 = vld [vmem:[%s3] sm:$0x1]
  %v55 = vperm.slane %v53, 0
  %v65 = vunpack.c.l.b16 %v33
  %v66 = vunpack.c.l.b16 %v34
  %v67 = vunpack.c.l.b16 %v35
  %v68 = vunpack.c.l.b16 %v36
  %v69 = vunpack.c.l.b16 %v37
  %v70 = vunpack.c.l.b16 %v38
  %v71 = vunpack.c.l.b16 %v39
  %v72 = vunpack.c.l.b16 %v40
  %v73 = vpack.c.b16 %v66, %v65
  %v74 = vpack.c.b16 %v68, %v67
  %v75 = vpack.c.b16 %v70, %v69
  %v76 = vpack.c.b16 %v72, %v71
  %v85 = vunpack.c.l.b16 %v41
  %v86 = vunpack.c.l.b16 %v42
  %v87 = vunpack.c.l.b16 %v43
  %v88 = vunpack.c.l.b16 %v44
  %v89 = vunpack.c.l.b16 %v45
  %v90 = vunpack.c.l.b16 %v46
  %v91 = vunpack.c.l.b16 %v47
  %v92 = vunpack.c.l.b16 %v48
  %v93 = vpack.c.b16 %v86, %v85
  %v94 = vpack.c.b16 %v88, %v87
  %v95 = vpack.c.b16 %v90, %v89
  %v96 = vpack.c.b16 %v92, %v91
  %vm101 = vcmask 523264
  %v103 = vsel %vm101, %v73, 0
  %v106 = vsel %vm101, %v74, 0
  %v109 = vsel %vm101, %v75, 0
  %v112 = vsel %vm101, %v76, 0
  %114 = vmatpush.bf16.msra.mxu0 0
  %115 = vmatpush.bf16.msra.mxu0 0
  %116 = vmatpush.bf16.msra.mxu0 0
  %117 = vmatpush.bf16.msra.mxu0 0
  %118 = vmatpush.bf16.msra.mxu0 %v96
  %119 = vmatpush.bf16.msra.mxu0 %v95
  %120 = vmatpush.bf16.msra.mxu0 %v94
  %121 = vmatpush.bf16.msra.mxu0 %v93
  %122 = vmatmul.bf16.gmra.mxu0 %v103
  %v123 = vpop.f32.mrf.mxu0
  %v124 = vadd.f32 %v55, %v123
  %v125 = vpop.f32.mrf.mxu0
  %v126 = vadd.f32 %v55, %v125
  %127 = vmatmul.bf16.gmra.mxu0 %v106
  %v128 = vpop.f32.mrf.mxu0
  %v129 = vadd.f32 %v55, %v128
  %v130 = vpop.f32.mrf.mxu0
  %v131 = vadd.f32 %v55, %v130
  %132 = vmatmul.bf16.gmra.mxu0 %v109
  %v133 = vpop.f32.mrf.mxu0
  %v134 = vadd.f32 %v55, %v133
  %v135 = vpop.f32.mrf.mxu0
  %v136 = vadd.f32 %v55, %v135
  %137 = vmatmul.bf16.gmra.mxu0 %v112
  %v138 = vpop.f32.mrf.mxu0
  %v139 = vadd.f32 %v55, %v138
  %v140 = vpop.f32.mrf.mxu0
  %v141 = vadd.f32 %v55, %v140
  %142 = vdwg.mxu0
  %143 = vst [vmem:[#allocation2] sm:$0xff] %v124
  %144 = vst [vmem:[#allocation2 + $0x8] sm:$0xff] %v126
  %145 = vst [vmem:[#allocation2 + $0x10] sm:$0xff] %v129
  %146 = vst [vmem:[#allocation2 + $0x18] sm:$0xff] %v131
  %147 = vst [vmem:[#allocation2 + $0x20] sm:$0xff] %v134
  %148 = vst [vmem:[#allocation2 + $0x28] sm:$0xff] %v136
  %149 = vst [vmem:[#allocation2 + $0x30] sm:$0xff] %v139
  %150 = vst [vmem:[#allocation2 + $0x38] sm:$0xff] %v141
  %v151 = vld [vmem:[#allocation2] sm:$0xff]
  %v156 = vunpack.c.l.b16 %v49
  %v157 = vunpack.c.l.b16 %v50
  %v158 = vunpack.c.l.b16 %v51
  %v159 = vunpack.c.l.b16 %v52
  %v160 = vpack.c.b16 %v157, %v156
  %v161 = vpack.c.b16 %v159, %v158
  %vm164 = vcmask 261120
  %v166 = vsel %vm164, 0, 0
  %168 = vmatpush.bf16.msra.mxu0 0
  %169 = vmatpush.bf16.msra.mxu0 0
  %170 = vmatpush.bf16.msra.mxu0 0
  %171 = vmatpush.bf16.msra.mxu0 0
  %172 = vmatpush.bf16.msra.mxu0 0
  %173 = vmatpush.bf16.msra.mxu0 0
  %174 = vmatpush.bf16.msra.mxu0 %v161
  %175 = vmatpush.bf16.msra.mxu0 %v160
  %176 = vmatmul.bf16.gmra.mxu0 %v166
  %v177 = vpop.f32.mrf.mxu0
  %v178 = vadd.f32 0.0, %v177
  %v179 = vpop.f32.mrf.mxu0
  %180 = vdwg.mxu0
  %v181 = vadd.f32 %v151, %v178
  %v182 = vxor.u32 %v181, 2147483648
  %v183 = vmul.f32 %v182, 1.442695
  %v184 = vpow.pop %v183
  %v185 = vadd.f32 %v184, 1.0
  %v186 = vrcp.pop %v185
  %v187 = vmul.f32 %v185, %v186
  %v188 = vsub.f32 1.0, %v187
  %v189 = vmul.f32 %v186, %v188
  %v190 = vadd.f32 %v186, %v189
  %vm191 = vweird.f32 %v185
  %vm192 = vweird.f32 %v186
  %vm193 = vmor %vm191, %vm192
  %v194 = vsel %vm193, %v186, %v190
  %v195 = vand.u32 2147483647, %v185
  %vm196 = vcmp.eq.f32.partialorder %v195, 8.507059e+37
  %v197 = vand.u32 %v185, 2147483648
  %v198 = vor.u32 1.1754944e-38, %v197
  %v199 = vsel %vm196, %v198, %v194
  %v200 = vmul.f32 1.0, %v199
  %v201 = vtanh.pop %v181
  %v202 = vmul.f32 %v200, 0.0
  %204 = vrot.lane.b32.xlu0 %v201, 64
  %v205 = vpop.permute.xlu0 %204
  %v207 = vmul.f32 %v200, %v205
  %209 = vrot.lane.b32.xlu0 %v207, 32
  %v210 = vpop.permute.xlu0 %209
  %v212 = vadd.f32 %v202, %v210
  %v213 = vtanh.pop %v212
  %215 = vrot.lane.b32.xlu0 %v213, 64
  %v216 = vpop.permute.xlu0 %215
  %v218 = vmul.f32 %v200, %v216
  %220 = vrot.lane.b32.xlu0 %v218, 32
  %v221 = vpop.permute.xlu0 %220
  %223 = vst.msk [vmem:[#allocation3] sm:$0xff] %vm164, %v221
  %s224 = scalar_lea.vmem [#allocation2], 8
  %v225 = vld [vmem:[%s224] sm:$0xff]
  %v226 = vpack.c.bf16 %v218, %v218
  %228 = vrot.lane.b32.xlu0 %v226, 32
  %v229 = vpop.permute.xlu0 %228
  %v231 = vsel %vm164, %v229, 0
  %233 = vmatpush.bf16.msra.mxu0 0
  %234 = vmatpush.bf16.msra.mxu0 0
  %235 = vmatpush.bf16.msra.mxu0 0
  %236 = vmatpush.bf16.msra.mxu0 0
  %237 = vmatpush.bf16.msra.mxu0 0
  %238 = vmatpush.bf16.msra.mxu0 0
  %239 = vmatpush.bf16.msra.mxu0 %v161
  %240 = vmatpush.bf16.msra.mxu0 %v160
  %241 = vmatmul.bf16.gmra.mxu0 %v231
  %v242 = vpop.f32.mrf.mxu0
  %v243 = vadd.f32 0.0, %v242
  %v244 = vpop.f32.mrf.mxu0
  %245 = vdwg.mxu0
  %v246 = vadd.f32 %v225, %v243
  %v247 = vxor.u32 %v246, 2147483648
  %v248 = vmul.f32 %v247, 1.442695
  %v249 = vpow.pop %v248
  %v250 = vadd.f32 %v249, 1.0
  %v251 = vrcp.pop %v250
  %v252 = vmul.f32 %v250, %v251
  %v253 = vsub.f32 1.0, %v252
  %v254 = vmul.f32 %v251, %v253
  %v255 = vadd.f32 %v251, %v254
  %vm256 = vweird.f32 %v250
  %vm257 = vweird.f32 %v251
  %vm258 = vmor %vm256, %vm257
  %v259 = vsel %vm258, %v251, %v255
  %v260 = vand.u32 2147483647, %v250
  %vm261 = vcmp.eq.f32.partialorder %v260, 8.507059e+37
  %v262 = vand.u32 %v250, 2147483648
  %v263 = vor.u32 1.1754944e-38, %v262
  %v264 = vsel %vm261, %v263, %v259
  %v265 = vmul.f32 1.0, %v264
  %v266 = vtanh.pop %v246
  %v267 = vmul.f32 %v265, %v212
  %269 = vrot.lane.b32.xlu0 %v266, 64
  %v270 = vpop.permute.xlu0 %269
  %v272 = vmul.f32 %v265, %v270
  %274 = vrot.lane.b32.xlu0 %v272, 32
  %v275 = vpop.permute.xlu0 %274
  %v277 = vadd.f32 %v267, %v275
  %v278 = vtanh.pop %v277
  %280 = vrot.lane.b32.xlu0 %v278, 64
  %v281 = vpop.permute.xlu0 %280
  %v283 = vmul.f32 %v265, %v281
  %285 = vrot.lane.b32.xlu0 %v283, 32
  %v286 = vpop.permute.xlu0 %285
  %s288 = scalar_lea.vmem [#allocation3], 8
  %289 = vst.msk [vmem:[%s288] sm:$0xff] %vm164, %v286
  %s290 = scalar_lea.vmem [#allocation2], 16
  %v291 = vld [vmem:[%s290] sm:$0xff]
  %v292 = vpack.c.bf16 %v283, %v283
  %294 = vrot.lane.b32.xlu0 %v292, 32
  %v295 = vpop.permute.xlu0 %294
  %v297 = vsel %vm164, %v295, 0
  %299 = vmatpush.bf16.msra.mxu0 0
  %300 = vmatpush.bf16.msra.mxu0 0
  %301 = vmatpush.bf16.msra.mxu0 0
  %302 = vmatpush.bf16.msra.mxu0 0
  %303 = vmatpush.bf16.msra.mxu0 0
  %304 = vmatpush.bf16.msra.mxu0 0
  %305 = vmatpush.bf16.msra.mxu0 %v161
  %306 = vmatpush.bf16.msra.mxu0 %v160
  %307 = vmatmul.bf16.gmra.mxu0 %v297
  %v308 = vpop.f32.mrf.mxu0
  %v309 = vadd.f32 0.0, %v308
  %v310 = vpop.f32.mrf.mxu0
  %311 = vdwg.mxu0
  %v312 = vadd.f32 %v291, %v309
  %v313 = vxor.u32 %v312, 2147483648
  %v314 = vmul.f32 %v313, 1.442695
  %v315 = vpow.pop %v314
  %v316 = vadd.f32 %v315, 1.0
  %v317 = vrcp.pop %v316
  %v318 = vmul.f32 %v316, %v317
  %v319 = vsub.f32 1.0, %v318
  %v320 = vmul.f32 %v317, %v319
  %v321 = vadd.f32 %v317, %v320
  %vm322 = vweird.f32 %v316
  %vm323 = vweird.f32 %v317
  %vm324 = vmor %vm322, %vm323
  %v325 = vsel %vm324, %v317, %v321
  %v326 = vand.u32 2147483647, %v316
  %vm327 = vcmp.eq.f32.partialorder %v326, 8.507059e+37
  %v328 = vand.u32 %v316, 2147483648
  %v329 = vor.u32 1.1754944e-38, %v328
  %v330 = vsel %vm327, %v329, %v325
  %v331 = vmul.f32 1.0, %v330
  %v332 = vtanh.pop %v312
  %v333 = vmul.f32 %v331, %v277
  %335 = vrot.lane.b32.xlu0 %v332, 64
  %v336 = vpop.permute.xlu0 %335
  %v338 = vmul.f32 %v331, %v336
  %340 = vrot.lane.b32.xlu0 %v338, 32
  %v341 = vpop.permute.xlu0 %340
  %v343 = vadd.f32 %v333, %v341
  %v344 = vtanh.pop %v343
  %346 = vrot.lane.b32.xlu0 %v344, 64
  %v347 = vpop.permute.xlu0 %346
  %v349 = vmul.f32 %v331, %v347
  %351 = vrot.lane.b32.xlu0 %v349, 32
  %v352 = vpop.permute.xlu0 %351
  %s354 = scalar_lea.vmem [#allocation3], 16
  %355 = vst.msk [vmem:[%s354] sm:$0xff] %vm164, %v352
  %s356 = scalar_lea.vmem [#allocation2], 24
  %v357 = vld [vmem:[%s356] sm:$0xff]
  %v358 = vpack.c.bf16 %v349, %v349
  %360 = vrot.lane.b32.xlu0 %v358, 32
  %v361 = vpop.permute.xlu0 %360
  %v363 = vsel %vm164, %v361, 0
  %365 = vmatpush.bf16.msra.mxu0 0
  %366 = vmatpush.bf16.msra.mxu0 0
  %367 = vmatpush.bf16.msra.mxu0 0
  %368 = vmatpush.bf16.msra.mxu0 0
  %369 = vmatpush.bf16.msra.mxu0 0
  %370 = vmatpush.bf16.msra.mxu0 0
  %371 = vmatpush.bf16.msra.mxu0 %v161
  %372 = vmatpush.bf16.msra.mxu0 %v160
  %373 = vmatmul.bf16.gmra.mxu0 %v363
  %v374 = vpop.f32.mrf.mxu0
  %v375 = vadd.f32 0.0, %v374
  %v376 = vpop.f32.mrf.mxu0
  %377 = vdwg.mxu0
  %v378 = vadd.f32 %v357, %v375
  %v379 = vxor.u32 %v378, 2147483648
  %v380 = vmul.f32 %v379, 1.442695
  %v381 = vpow.pop %v380
  %v382 = vadd.f32 %v381, 1.0
  %v383 = vrcp.pop %v382
  %v384 = vmul.f32 %v382, %v383
  %v385 = vsub.f32 1.0, %v384
  %v386 = vmul.f32 %v383, %v385
  %v387 = vadd.f32 %v383, %v386
  %vm388 = vweird.f32 %v382
  %vm389 = vweird.f32 %v383
  %vm390 = vmor %vm388, %vm389
  %v391 = vsel %vm390, %v383, %v387
  %v392 = vand.u32 2147483647, %v382
  %vm393 = vcmp.eq.f32.partialorder %v392, 8.507059e+37
  %v394 = vand.u32 %v382, 2147483648
  %v395 = vor.u32 1.1754944e-38, %v394
  %v396 = vsel %vm393, %v395, %v391
  %v397 = vmul.f32 1.0, %v396
  %v398 = vtanh.pop %v378
  %v399 = vmul.f32 %v397, %v343
  %401 = vrot.lane.b32.xlu0 %v398, 64
  %v402 = vpop.permute.xlu0 %401
  %v404 = vmul.f32 %v397, %v402
  %406 = vrot.lane.b32.xlu0 %v404, 32
  %v407 = vpop.permute.xlu0 %406
  %v409 = vadd.f32 %v399, %v407
  %v410 = vtanh.pop %v409
  %412 = vrot.lane.b32.xlu0 %v410, 64
  %v413 = vpop.permute.xlu0 %412
  %v415 = vmul.f32 %v397, %v413
  %417 = vrot.lane.b32.xlu0 %v415, 32
  %v418 = vpop.permute.xlu0 %417
  %s420 = scalar_lea.vmem [#allocation3], 24
  %421 = vst.msk [vmem:[%s420] sm:$0xff] %vm164, %v418
  %s422 = scalar_lea.vmem [#allocation2], 32
  %v423 = vld [vmem:[%s422] sm:$0xff]
  %v424 = vpack.c.bf16 %v415, %v415
  %426 = vrot.lane.b32.xlu0 %v424, 32
  %v427 = vpop.permute.xlu0 %426
  %v429 = vsel %vm164, %v427, 0
  %431 = vmatpush.bf16.msra.mxu0 0
  %432 = vmatpush.bf16.msra.mxu0 0
  %433 = vmatpush.bf16.msra.mxu0 0
  %434 = vmatpush.bf16.msra.mxu0 0
  %435 = vmatpush.bf16.msra.mxu0 0
  %436 = vmatpush.bf16.msra.mxu0 0
  %437 = vmatpush.bf16.msra.mxu0 %v161
  %438 = vmatpush.bf16.msra.mxu0 %v160
  %439 = vmatmul.bf16.gmra.mxu0 %v429
  %v440 = vpop.f32.mrf.mxu0
  %v441 = vadd.f32 0.0, %v440
  %v442 = vpop.f32.mrf.mxu0
  %443 = vdwg.mxu0
  %v444 = vadd.f32 %v423, %v441
  %v445 = vxor.u32 %v444, 2147483648
  %v446 = vmul.f32 %v445, 1.442695
  %v447 = vpow.pop %v446
  %v448 = vadd.f32 %v447, 1.0
  %v449 = vrcp.pop %v448
  %v450 = vmul.f32 %v448, %v449
  %v451 = vsub.f32 1.0, %v450
  %v452 = vmul.f32 %v449, %v451
  %v453 = vadd.f32 %v449, %v452
  %vm454 = vweird.f32 %v448
  %vm455 = vweird.f32 %v449
  %vm456 = vmor %vm454, %vm455
  %v457 = vsel %vm456, %v449, %v453
  %v458 = vand.u32 2147483647, %v448
  %vm459 = vcmp.eq.f32.partialorder %v458, 8.507059e+37
  %v460 = vand.u32 %v448, 2147483648
  %v461 = vor.u32 1.1754944e-38, %v460
  %v462 = vsel %vm459, %v461, %v457
  %v463 = vmul.f32 1.0, %v462
  %v464 = vtanh.pop %v444
  %v465 = vmul.f32 %v463, %v409
  %467 = vrot.lane.b32.xlu0 %v464, 64
  %v468 = vpop.permute.xlu0 %467
  %v470 = vmul.f32 %v463, %v468
  %472 = vrot.lane.b32.xlu0 %v470, 32
  %v473 = vpop.permute.xlu0 %472
  %v475 = vadd.f32 %v465, %v473
  %v476 = vtanh.pop %v475
  %478 = vrot.lane.b32.xlu0 %v476, 64
  %v479 = vpop.permute.xlu0 %478
  %v481 = vmul.f32 %v463, %v479
  %483 = vrot.lane.b32.xlu0 %v481, 32
  %v484 = vpop.permute.xlu0 %483
  %s486 = scalar_lea.vmem [#allocation3], 32
  %487 = vst.msk [vmem:[%s486] sm:$0xff] %vm164, %v484
  %s488 = scalar_lea.vmem [#allocation2], 40
  %v489 = vld [vmem:[%s488] sm:$0xff]
  %v490 = vpack.c.bf16 %v481, %v481
  %492 = vrot.lane.b32.xlu0 %v490, 32
  %v493 = vpop.permute.xlu0 %492
  %v495 = vsel %vm164, %v493, 0
  %497 = vmatpush.bf16.msra.mxu0 0
  %498 = vmatpush.bf16.msra.mxu0 0
  %499 = vmatpush.bf16.msra.mxu0 0
  %500 = vmatpush.bf16.msra.mxu0 0
  %501 = vmatpush.bf16.msra.mxu0 0
  %502 = vmatpush.bf16.msra.mxu0 0
  %503 = vmatpush.bf16.msra.mxu0 %v161
  %504 = vmatpush.bf16.msra.mxu0 %v160
  %505 = vmatmul.bf16.gmra.mxu0 %v495
  %v506 = vpop.f32.mrf.mxu0
  %v507 = vadd.f32 0.0, %v506
  %v508 = vpop.f32.mrf.mxu0
  %509 = vdwg.mxu0
  %v510 = vadd.f32 %v489, %v507
  %v511 = vxor.u32 %v510, 2147483648
  %v512 = vmul.f32 %v511, 1.442695
  %v513 = vpow.pop %v512
  %v514 = vadd.f32 %v513, 1.0
  %v515 = vrcp.pop %v514
  %v516 = vmul.f32 %v514, %v515
  %v517 = vsub.f32 1.0, %v516
  %v518 = vmul.f32 %v515, %v517
  %v519 = vadd.f32 %v515, %v518
  %vm520 = vweird.f32 %v514
  %vm521 = vweird.f32 %v515
  %vm522 = vmor %vm520, %vm521
  %v523 = vsel %vm522, %v515, %v519
  %v524 = vand.u32 2147483647, %v514
  %vm525 = vcmp.eq.f32.partialorder %v524, 8.507059e+37
  %v526 = vand.u32 %v514, 2147483648
  %v527 = vor.u32 1.1754944e-38, %v526
  %v528 = vsel %vm525, %v527, %v523
  %v529 = vmul.f32 1.0, %v528
  %v530 = vtanh.pop %v510
  %v531 = vmul.f32 %v529, %v475
  %533 = vrot.lane.b32.xlu0 %v530, 64
  %v534 = vpop.permute.xlu0 %533
  %v536 = vmul.f32 %v529, %v534
  %538 = vrot.lane.b32.xlu0 %v536, 32
  %v539 = vpop.permute.xlu0 %538
  %v541 = vadd.f32 %v531, %v539
  %v542 = vtanh.pop %v541
  %544 = vrot.lane.b32.xlu0 %v542, 64
  %v545 = vpop.permute.xlu0 %544
  %v547 = vmul.f32 %v529, %v545
  %549 = vrot.lane.b32.xlu0 %v547, 32
  %v550 = vpop.permute.xlu0 %549
  %s552 = scalar_lea.vmem [#allocation3], 40
  %553 = vst.msk [vmem:[%s552] sm:$0xff] %vm164, %v550
  %s554 = scalar_lea.vmem [#allocation2], 48
  %v555 = vld [vmem:[%s554] sm:$0xff]
  %v556 = vpack.c.bf16 %v547, %v547
  %558 = vrot.lane.b32.xlu0 %v556, 32
  %v559 = vpop.permute.xlu0 %558
  %v561 = vsel %vm164, %v559, 0
  %563 = vmatpush.bf16.msra.mxu0 0
  %564 = vmatpush.bf16.msra.mxu0 0
  %565 = vmatpush.bf16.msra.mxu0 0
  %566 = vmatpush.bf16.msra.mxu0 0
  %567 = vmatpush.bf16.msra.mxu0 0
  %568 = vmatpush.bf16.msra.mxu0 0
  %569 = vmatpush.bf16.msra.mxu0 %v161
  %570 = vmatpush.bf16.msra.mxu0 %v160
  %571 = vmatmul.bf16.gmra.mxu0 %v561
  %v572 = vpop.f32.mrf.mxu0
  %v573 = vadd.f32 0.0, %v572
  %v574 = vpop.f32.mrf.mxu0
  %575 = vdwg.mxu0
  %v576 = vadd.f32 %v555, %v573
  %v577 = vxor.u32 %v576, 2147483648
  %v578 = vmul.f32 %v577, 1.442695
  %v579 = vpow.pop %v578
  %v580 = vadd.f32 %v579, 1.0
  %v581 = vrcp.pop %v580
  %v582 = vmul.f32 %v580, %v581
  %v583 = vsub.f32 1.0, %v582
  %v584 = vmul.f32 %v581, %v583
  %v585 = vadd.f32 %v581, %v584
  %vm586 = vweird.f32 %v580
  %vm587 = vweird.f32 %v581
  %vm588 = vmor %vm586, %vm587
  %v589 = vsel %vm588, %v581, %v585
  %v590 = vand.u32 2147483647, %v580
  %vm591 = vcmp.eq.f32.partialorder %v590, 8.507059e+37
  %v592 = vand.u32 %v580, 2147483648
  %v593 = vor.u32 1.1754944e-38, %v592
  %v594 = vsel %vm591, %v593, %v589
  %v595 = vmul.f32 1.0, %v594
  %v596 = vtanh.pop %v576
  %v597 = vmul.f32 %v595, %v541
  %599 = vrot.lane.b32.xlu0 %v596, 64
  %v600 = vpop.permute.xlu0 %599
  %v602 = vmul.f32 %v595, %v600
  %604 = vrot.lane.b32.xlu0 %v602, 32
  %v605 = vpop.permute.xlu0 %604
  %v607 = vadd.f32 %v597, %v605
  %v608 = vtanh.pop %v607
  %610 = vrot.lane.b32.xlu0 %v608, 64
  %v611 = vpop.permute.xlu0 %610
  %v613 = vmul.f32 %v595, %v611
  %615 = vrot.lane.b32.xlu0 %v613, 32
  %v616 = vpop.permute.xlu0 %615
  %s618 = scalar_lea.vmem [#allocation3], 48
  %619 = vst.msk [vmem:[%s618] sm:$0xff] %vm164, %v616
  %s620 = scalar_lea.vmem [#allocation2], 56
  %v621 = vld [vmem:[%s620] sm:$0xff]
  %v622 = vpack.c.bf16 %v613, %v613
  %624 = vrot.lane.b32.xlu0 %v622, 32
  %v625 = vpop.permute.xlu0 %624
  %v627 = vsel %vm164, %v625, 0
  %629 = vmatpush.bf16.msra.mxu0 0
  %630 = vmatpush.bf16.msra.mxu0 0
  %631 = vmatpush.bf16.msra.mxu0 0
  %632 = vmatpush.bf16.msra.mxu0 0
  %633 = vmatpush.bf16.msra.mxu0 0
  %634 = vmatpush.bf16.msra.mxu0 0
  %635 = vmatpush.bf16.msra.mxu0 %v161
  %636 = vmatpush.bf16.msra.mxu0 %v160
  %637 = vmatmul.bf16.gmra.mxu0 %v627
  %v638 = vpop.f32.mrf.mxu0
  %v639 = vadd.f32 0.0, %v638
  %v640 = vpop.f32.mrf.mxu0
  %641 = vdwg.mxu0
  %v642 = vadd.f32 %v621, %v639
  %v643 = vxor.u32 %v642, 2147483648
  %v644 = vmul.f32 %v643, 1.442695
  %v645 = vpow.pop %v644
  %v646 = vadd.f32 %v645, 1.0
  %v647 = vrcp.pop %v646
  %v648 = vmul.f32 %v646, %v647
  %v649 = vsub.f32 1.0, %v648
  %v650 = vmul.f32 %v647, %v649
  %v651 = vadd.f32 %v647, %v650
  %vm652 = vweird.f32 %v646
  %vm653 = vweird.f32 %v647
  %vm654 = vmor %vm652, %vm653
  %v655 = vsel %vm654, %v647, %v651
  %v656 = vand.u32 2147483647, %v646
  %vm657 = vcmp.eq.f32.partialorder %v656, 8.507059e+37
  %v658 = vand.u32 %v646, 2147483648
  %v659 = vor.u32 1.1754944e-38, %v658
  %v660 = vsel %vm657, %v659, %v655
  %v661 = vmul.f32 1.0, %v660
  %v662 = vtanh.pop %v642
  %v663 = vmul.f32 %v661, %v607
  %665 = vrot.lane.b32.xlu0 %v662, 64
  %v666 = vpop.permute.xlu0 %665
  %v668 = vmul.f32 %v661, %v666
  %670 = vrot.lane.b32.xlu0 %v668, 32
  %v671 = vpop.permute.xlu0 %670
  %v673 = vadd.f32 %v663, %v671
  %v674 = vtanh.pop %v673
  %676 = vrot.lane.b32.xlu0 %v674, 64
  %v677 = vpop.permute.xlu0 %676
  %v679 = vmul.f32 %v661, %v677
  %681 = vrot.lane.b32.xlu0 %v679, 32
  %v682 = vpop.permute.xlu0 %681
  %s684 = scalar_lea.vmem [#allocation3], 56
  %685 = vst.msk [vmem:[%s684] sm:$0xff] %vm164, %v682
  %v686 = vld [vmem:[#allocation3] sm:$0xff]
  %v687 = vld [vmem:[#allocation3 + $0x8] sm:$0xff]
  %v688 = vld [vmem:[#allocation3 + $0x10] sm:$0xff]
  %v689 = vld [vmem:[#allocation3 + $0x18] sm:$0xff]
  %v690 = vld [vmem:[#allocation3 + $0x20] sm:$0xff]
  %v691 = vld [vmem:[#allocation3 + $0x28] sm:$0xff]
  %v692 = vld [vmem:[#allocation3 + $0x30] sm:$0xff]
  %v693 = vld [vmem:[#allocation3 + $0x38] sm:$0xff]
  %v694 = vpack.c.bf16 %v687, %v686
  %v695 = vpack.c.bf16 %v689, %v688
  %v696 = vpack.c.bf16 %v691, %v690
  %v697 = vpack.c.bf16 %v693, %v692
  %v698 = vld [vmem:[%s4] sm:$0xf]
  %v699 = vld [vmem:[%s4 + $0x4] sm:$0xf]
  %v700 = vld [vmem:[%s4 + $0x8] sm:$0xf]
  %v701 = vld [vmem:[%s4 + $0xc] sm:$0xf]
  %v702 = vld [vmem:[%s5] sm:$0xf]
  %v703 = vld [vmem:[%s5 + $0x4] sm:$0xf]
  %v704 = vld [vmem:[%s5 + $0x8] sm:$0xf]
  %v705 = vld [vmem:[%s5 + $0xc] sm:$0xf]
  %v706 = vld [vmem:[%s6] sm:$0x1]
  %v708 = vperm.slane %v706, 0
  %v714 = vunpack.c.l.b16 %v698
  %v715 = vunpack.c.l.b16 %v699
  %v716 = vunpack.c.l.b16 %v700
  %v717 = vunpack.c.l.b16 %v701
  %v718 = vpack.c.b16 %v715, %v714
  %v719 = vpack.c.b16 %v717, %v716
  %v723 = vsel %vm164, %v694, 0
  %v726 = vsel %vm164, %v695, 0
  %v729 = vsel %vm164, %v696, 0
  %v732 = vsel %vm164, %v697, 0
  %734 = vmatpush.bf16.msra.mxu0 0
  %735 = vmatpush.bf16.msra.mxu0 0
  %736 = vmatpush.bf16.msra.mxu0 0
  %737 = vmatpush.bf16.msra.mxu0 0
  %738 = vmatpush.bf16.msra.mxu0 0
  %739 = vmatpush.bf16.msra.mxu0 0
  %740 = vmatpush.bf16.msra.mxu0 %v719
  %741 = vmatpush.bf16.msra.mxu0 %v718
  %742 = vmatmul.bf16.gmra.mxu0 %v723
  %v743 = vpop.f32.mrf.mxu0
  %v744 = vadd.f32 %v708, %v743
  %v745 = vpop.f32.mrf.mxu0
  %v746 = vadd.f32 %v708, %v745
  %747 = vmatmul.bf16.gmra.mxu0 %v726
  %v748 = vpop.f32.mrf.mxu0
  %v749 = vadd.f32 %v708, %v748
  %v750 = vpop.f32.mrf.mxu0
  %v751 = vadd.f32 %v708, %v750
  %752 = vmatmul.bf16.gmra.mxu0 %v729
  %v753 = vpop.f32.mrf.mxu0
  %v754 = vadd.f32 %v708, %v753
  %v755 = vpop.f32.mrf.mxu0
  %v756 = vadd.f32 %v708, %v755
  %757 = vmatmul.bf16.gmra.mxu0 %v732
  %v758 = vpop.f32.mrf.mxu0
  %v759 = vadd.f32 %v708, %v758
  %v760 = vpop.f32.mrf.mxu0
  %v761 = vadd.f32 %v708, %v760
  %762 = vdwg.mxu0
  %763 = vst [vmem:[#allocation2] sm:$0xff] %v744
  %764 = vst [vmem:[#allocation2 + $0x8] sm:$0xff] %v746
  %765 = vst [vmem:[#allocation2 + $0x10] sm:$0xff] %v749
  %766 = vst [vmem:[#allocation2 + $0x18] sm:$0xff] %v751
  %767 = vst [vmem:[#allocation2 + $0x20] sm:$0xff] %v754
  %768 = vst [vmem:[#allocation2 + $0x28] sm:$0xff] %v756
  %769 = vst [vmem:[#allocation2 + $0x30] sm:$0xff] %v759
  %770 = vst [vmem:[#allocation2 + $0x38] sm:$0xff] %v761
  %v771 = vld [vmem:[#allocation2] sm:$0xff]
  %v776 = vunpack.c.l.b16 %v702
  %v777 = vunpack.c.l.b16 %v703
  %v778 = vunpack.c.l.b16 %v704
  %v779 = vunpack.c.l.b16 %v705
  %v780 = vpack.c.b16 %v777, %v776
  %v781 = vpack.c.b16 %v779, %v778
  %784 = vmatpush.bf16.msra.mxu0 0
  %785 = vmatpush.bf16.msra.mxu0 0
  %786 = vmatpush.bf16.msra.mxu0 0
  %787 = vmatpush.bf16.msra.mxu0 0
  %788 = vmatpush.bf16.msra.mxu0 0
  %789 = vmatpush.bf16.msra.mxu0 0
  %790 = vmatpush.bf16.msra.mxu0 %v781
  %791 = vmatpush.bf16.msra.mxu0 %v780
  %792 = vmatmul.bf16.gmra.mxu0 %v166
  %v793 = vpop.f32.mrf.mxu0
  %v794 = vadd.f32 0.0, %v793
  %v795 = vpop.f32.mrf.mxu0
  %796 = vdwg.mxu0
  %v797 = vadd.f32 %v771, %v794
  %v798 = vxor.u32 %v797, 2147483648
  %v799 = vmul.f32 %v798, 1.442695
  %v800 = vpow.pop %v799
  %v801 = vadd.f32 %v800, 1.0
  %v802 = vrcp.pop %v801
  %v803 = vmul.f32 %v801, %v802
  %v804 = vsub.f32 1.0, %v803
  %v805 = vmul.f32 %v802, %v804
  %v806 = vadd.f32 %v802, %v805
  %vm807 = vweird.f32 %v801
  %vm808 = vweird.f32 %v802
  %vm809 = vmor %vm807, %vm808
  %v810 = vsel %vm809, %v802, %v806
  %v811 = vand.u32 2147483647, %v801
  %vm812 = vcmp.eq.f32.partialorder %v811, 8.507059e+37
  %v813 = vand.u32 %v801, 2147483648
  %v814 = vor.u32 1.1754944e-38, %v813
  %v815 = vsel %vm812, %v814, %v810
  %v816 = vmul.f32 1.0, %v815
  %v817 = vtanh.pop %v797
  %v818 = vmul.f32 %v816, 0.0
  %820 = vrot.lane.b32.xlu0 %v817, 64
  %v821 = vpop.permute.xlu0 %820
  %v823 = vmul.f32 %v816, %v821
  %825 = vrot.lane.b32.xlu0 %v823, 32
  %v826 = vpop.permute.xlu0 %825
  %v828 = vadd.f32 %v818, %v826
  %v829 = vtanh.pop %v828
  %831 = vrot.lane.b32.xlu0 %v829, 64
  %v832 = vpop.permute.xlu0 %831
  %v834 = vmul.f32 %v816, %v832
  %v835 = vld [vmem:[%s224] sm:$0xff]
  %v836 = vpack.c.bf16 %v834, %v834
  %838 = vrot.lane.b32.xlu0 %v836, 32
  %v839 = vpop.permute.xlu0 %838
  %v841 = vsel %vm164, %v839, 0
  %843 = vmatpush.bf16.msra.mxu0 0
  %844 = vmatpush.bf16.msra.mxu0 0
  %845 = vmatpush.bf16.msra.mxu0 0
  %846 = vmatpush.bf16.msra.mxu0 0
  %847 = vmatpush.bf16.msra.mxu0 0
  %848 = vmatpush.bf16.msra.mxu0 0
  %849 = vmatpush.bf16.msra.mxu0 %v781
  %850 = vmatpush.bf16.msra.mxu0 %v780
  %851 = vmatmul.bf16.gmra.mxu0 %v841
  %v852 = vpop.f32.mrf.mxu0
  %v853 = vadd.f32 0.0, %v852
  %v854 = vpop.f32.mrf.mxu0
  %855 = vdwg.mxu0
  %v856 = vadd.f32 %v835, %v853
  %v857 = vxor.u32 %v856, 2147483648
  %v858 = vmul.f32 %v857, 1.442695
  %v859 = vpow.pop %v858
  %v860 = vadd.f32 %v859, 1.0
  %v861 = vrcp.pop %v860
  %v862 = vmul.f32 %v860, %v861
  %v863 = vsub.f32 1.0, %v862
  %v864 = vmul.f32 %v861, %v863
  %v865 = vadd.f32 %v861, %v864
  %vm866 = vweird.f32 %v860
  %vm867 = vweird.f32 %v861
  %vm868 = vmor %vm866, %vm867
  %v869 = vsel %vm868, %v861, %v865
  %v870 = vand.u32 2147483647, %v860
  %vm871 = vcmp.eq.f32.partialorder %v870, 8.507059e+37
  %v872 = vand.u32 %v860, 2147483648
  %v873 = vor.u32 1.1754944e-38, %v872
  %v874 = vsel %vm871, %v873, %v869
  %v875 = vmul.f32 1.0, %v874
  %v876 = vtanh.pop %v856
  %v877 = vmul.f32 %v875, %v828
  %879 = vrot.lane.b32.xlu0 %v876, 64
  %v880 = vpop.permute.xlu0 %879
  %v882 = vmul.f32 %v875, %v880
  %884 = vrot.lane.b32.xlu0 %v882, 32
  %v885 = vpop.permute.xlu0 %884
  %v887 = vadd.f32 %v877, %v885
  %v888 = vtanh.pop %v887
  %890 = vrot.lane.b32.xlu0 %v888, 64
  %v891 = vpop.permute.xlu0 %890
  %v893 = vmul.f32 %v875, %v891
  %v894 = vld [vmem:[%s290] sm:$0xff]
  %v895 = vpack.c.bf16 %v893, %v893
  %897 = vrot.lane.b32.xlu0 %v895, 32
  %v898 = vpop.permute.xlu0 %897
  %v900 = vsel %vm164, %v898, 0
  %902 = vmatpush.bf16.msra.mxu0 0
  %903 = vmatpush.bf16.msra.mxu0 0
  %904 = vmatpush.bf16.msra.mxu0 0
  %905 = vmatpush.bf16.msra.mxu0 0
  %906 = vmatpush.bf16.msra.mxu0 0
  %907 = vmatpush.bf16.msra.mxu0 0
  %908 = vmatpush.bf16.msra.mxu0 %v781
  %909 = vmatpush.bf16.msra.mxu0 %v780
  %910 = vmatmul.bf16.gmra.mxu0 %v900
  %v911 = vpop.f32.mrf.mxu0
  %v912 = vadd.f32 0.0, %v911
  %v913 = vpop.f32.mrf.mxu0
  %914 = vdwg.mxu0
  %v915 = vadd.f32 %v894, %v912
  %v916 = vxor.u32 %v915, 2147483648
  %v917 = vmul.f32 %v916, 1.442695
  %v918 = vpow.pop %v917
  %v919 = vadd.f32 %v918, 1.0
  %v920 = vrcp.pop %v919
  %v921 = vmul.f32 %v919, %v920
  %v922 = vsub.f32 1.0, %v921
  %v923 = vmul.f32 %v920, %v922
  %v924 = vadd.f32 %v920, %v923
  %vm925 = vweird.f32 %v919
  %vm926 = vweird.f32 %v920
  %vm927 = vmor %vm925, %vm926
  %v928 = vsel %vm927, %v920, %v924
  %v929 = vand.u32 2147483647, %v919
  %vm930 = vcmp.eq.f32.partialorder %v929, 8.507059e+37
  %v931 = vand.u32 %v919, 2147483648
  %v932 = vor.u32 1.1754944e-38, %v931
  %v933 = vsel %vm930, %v932, %v928
  %v934 = vmul.f32 1.0, %v933
  %v935 = vtanh.pop %v915
  %v936 = vmul.f32 %v934, %v887
  %938 = vrot.lane.b32.xlu0 %v935, 64
  %v939 = vpop.permute.xlu0 %938
  %v941 = vmul.f32 %v934, %v939
  %943 = vrot.lane.b32.xlu0 %v941, 32
  %v944 = vpop.permute.xlu0 %943
  %v946 = vadd.f32 %v936, %v944
  %v947 = vtanh.pop %v946
  %949 = vrot.lane.b32.xlu0 %v947, 64
  %v950 = vpop.permute.xlu0 %949
  %v952 = vmul.f32 %v934, %v950
  %v953 = vld [vmem:[%s356] sm:$0xff]
  %v954 = vpack.c.bf16 %v952, %v952
  %956 = vrot.lane.b32.xlu0 %v954, 32
  %v957 = vpop.permute.xlu0 %956
  %v959 = vsel %vm164, %v957, 0
  %961 = vmatpush.bf16.msra.mxu0 0
  %962 = vmatpush.bf16.msra.mxu0 0
  %963 = vmatpush.bf16.msra.mxu0 0
  %964 = vmatpush.bf16.msra.mxu0 0
  %965 = vmatpush.bf16.msra.mxu0 0
  %966 = vmatpush.bf16.msra.mxu0 0
  %967 = vmatpush.bf16.msra.mxu0 %v781
  %968 = vmatpush.bf16.msra.mxu0 %v780
  %969 = vmatmul.bf16.gmra.mxu0 %v959
  %v970 = vpop.f32.mrf.mxu0
  %v971 = vadd.f32 0.0, %v970
  %v972 = vpop.f32.mrf.mxu0
  %973 = vdwg.mxu0
  %v974 = vadd.f32 %v953, %v971
  %v975 = vxor.u32 %v974, 2147483648
  %v976 = vmul.f32 %v975, 1.442695
  %v977 = vpow.pop %v976
  %v978 = vadd.f32 %v977, 1.0
  %v979 = vrcp.pop %v978
  %v980 = vmul.f32 %v978, %v979
  %v981 = vsub.f32 1.0, %v980
  %v982 = vmul.f32 %v979, %v981
  %v983 = vadd.f32 %v979, %v982
  %vm984 = vweird.f32 %v978
  %vm985 = vweird.f32 %v979
  %vm986 = vmor %vm984, %vm985
  %v987 = vsel %vm986, %v979, %v983
  %v988 = vand.u32 2147483647, %v978
  %vm989 = vcmp.eq.f32.partialorder %v988, 8.507059e+37
  %v990 = vand.u32 %v978, 2147483648
  %v991 = vor.u32 1.1754944e-38, %v990
  %v992 = vsel %vm989, %v991, %v987
  %v993 = vmul.f32 1.0, %v992
  %v994 = vtanh.pop %v974
  %v995 = vmul.f32 %v993, %v946
  %997 = vrot.lane.b32.xlu0 %v994, 64
  %v998 = vpop.permute.xlu0 %997
  %v1000 = vmul.f32 %v993, %v998
  %1002 = vrot.lane.b32.xlu0 %v1000, 32
  %v1003 = vpop.permute.xlu0 %1002
  %v1005 = vadd.f32 %v995, %v1003
  %v1006 = vtanh.pop %v1005
  %1008 = vrot.lane.b32.xlu0 %v1006, 64
  %v1009 = vpop.permute.xlu0 %1008
  %v1011 = vmul.f32 %v993, %v1009
  %v1012 = vld [vmem:[%s422] sm:$0xff]
  %v1013 = vpack.c.bf16 %v1011, %v1011
  %1015 = vrot.lane.b32.xlu0 %v1013, 32
  %v1016 = vpop.permute.xlu0 %1015
  %v1018 = vsel %vm164, %v1016, 0
  %1020 = vmatpush.bf16.msra.mxu0 0
  %1021 = vmatpush.bf16.msra.mxu0 0
  %1022 = vmatpush.bf16.msra.mxu0 0
  %1023 = vmatpush.bf16.msra.mxu0 0
  %1024 = vmatpush.bf16.msra.mxu0 0
  %1025 = vmatpush.bf16.msra.mxu0 0
  %1026 = vmatpush.bf16.msra.mxu0 %v781
  %1027 = vmatpush.bf16.msra.mxu0 %v780
  %1028 = vmatmul.bf16.gmra.mxu0 %v1018
  %v1029 = vpop.f32.mrf.mxu0
  %v1030 = vadd.f32 0.0, %v1029
  %v1031 = vpop.f32.mrf.mxu0
  %1032 = vdwg.mxu0
  %v1033 = vadd.f32 %v1012, %v1030
  %v1034 = vxor.u32 %v1033, 2147483648
  %v1035 = vmul.f32 %v1034, 1.442695
  %v1036 = vpow.pop %v1035
  %v1037 = vadd.f32 %v1036, 1.0
  %v1038 = vrcp.pop %v1037
  %v1039 = vmul.f32 %v1037, %v1038
  %v1040 = vsub.f32 1.0, %v1039
  %v1041 = vmul.f32 %v1038, %v1040
  %v1042 = vadd.f32 %v1038, %v1041
  %vm1043 = vweird.f32 %v1037
  %vm1044 = vweird.f32 %v1038
  %vm1045 = vmor %vm1043, %vm1044
  %v1046 = vsel %vm1045, %v1038, %v1042
  %v1047 = vand.u32 2147483647, %v1037
  %vm1048 = vcmp.eq.f32.partialorder %v1047, 8.507059e+37
  %v1049 = vand.u32 %v1037, 2147483648
  %v1050 = vor.u32 1.1754944e-38, %v1049
  %v1051 = vsel %vm1048, %v1050, %v1046
  %v1052 = vmul.f32 1.0, %v1051
  %v1053 = vtanh.pop %v1033
  %v1054 = vmul.f32 %v1052, %v1005
  %1056 = vrot.lane.b32.xlu0 %v1053, 64
  %v1057 = vpop.permute.xlu0 %1056
  %v1059 = vmul.f32 %v1052, %v1057
  %1061 = vrot.lane.b32.xlu0 %v1059, 32
  %v1062 = vpop.permute.xlu0 %1061
  %v1064 = vadd.f32 %v1054, %v1062
  %v1065 = vtanh.pop %v1064
  %1067 = vrot.lane.b32.xlu0 %v1065, 64
  %v1068 = vpop.permute.xlu0 %1067
  %v1070 = vmul.f32 %v1052, %v1068
  %v1071 = vld [vmem:[%s488] sm:$0xff]
  %v1072 = vpack.c.bf16 %v1070, %v1070
  %1074 = vrot.lane.b32.xlu0 %v1072, 32
  %v1075 = vpop.permute.xlu0 %1074
  %v1077 = vsel %vm164, %v1075, 0
  %1079 = vmatpush.bf16.msra.mxu0 0
  %1080 = vmatpush.bf16.msra.mxu0 0
  %1081 = vmatpush.bf16.msra.mxu0 0
  %1082 = vmatpush.bf16.msra.mxu0 0
  %1083 = vmatpush.bf16.msra.mxu0 0
  %1084 = vmatpush.bf16.msra.mxu0 0
  %1085 = vmatpush.bf16.msra.mxu0 %v781
  %1086 = vmatpush.bf16.msra.mxu0 %v780
  %1087 = vmatmul.bf16.gmra.mxu0 %v1077
  %v1088 = vpop.f32.mrf.mxu0
  %v1089 = vadd.f32 0.0, %v1088
  %v1090 = vpop.f32.mrf.mxu0
  %1091 = vdwg.mxu0
  %v1092 = vadd.f32 %v1071, %v1089
  %v1093 = vxor.u32 %v1092, 2147483648
  %v1094 = vmul.f32 %v1093, 1.442695
  %v1095 = vpow.pop %v1094
  %v1096 = vadd.f32 %v1095, 1.0
  %v1097 = vrcp.pop %v1096
  %v1098 = vmul.f32 %v1096, %v1097
  %v1099 = vsub.f32 1.0, %v1098
  %v1100 = vmul.f32 %v1097, %v1099
  %v1101 = vadd.f32 %v1097, %v1100
  %vm1102 = vweird.f32 %v1096
  %vm1103 = vweird.f32 %v1097
  %vm1104 = vmor %vm1102, %vm1103
  %v1105 = vsel %vm1104, %v1097, %v1101
  %v1106 = vand.u32 2147483647, %v1096
  %vm1107 = vcmp.eq.f32.partialorder %v1106, 8.507059e+37
  %v1108 = vand.u32 %v1096, 2147483648
  %v1109 = vor.u32 1.1754944e-38, %v1108
  %v1110 = vsel %vm1107, %v1109, %v1105
  %v1111 = vmul.f32 1.0, %v1110
  %v1112 = vtanh.pop %v1092
  %v1113 = vmul.f32 %v1111, %v1064
  %1115 = vrot.lane.b32.xlu0 %v1112, 64
  %v1116 = vpop.permute.xlu0 %1115
  %v1118 = vmul.f32 %v1111, %v1116
  %1120 = vrot.lane.b32.xlu0 %v1118, 32
  %v1121 = vpop.permute.xlu0 %1120
  %v1123 = vadd.f32 %v1113, %v1121
  %v1124 = vtanh.pop %v1123
  %1126 = vrot.lane.b32.xlu0 %v1124, 64
  %v1127 = vpop.permute.xlu0 %1126
  %v1129 = vmul.f32 %v1111, %v1127
  %v1130 = vld [vmem:[%s554] sm:$0xff]
  %v1131 = vpack.c.bf16 %v1129, %v1129
  %1133 = vrot.lane.b32.xlu0 %v1131, 32
  %v1134 = vpop.permute.xlu0 %1133
  %v1136 = vsel %vm164, %v1134, 0
  %1138 = vmatpush.bf16.msra.mxu0 0
  %1139 = vmatpush.bf16.msra.mxu0 0
  %1140 = vmatpush.bf16.msra.mxu0 0
  %1141 = vmatpush.bf16.msra.mxu0 0
  %1142 = vmatpush.bf16.msra.mxu0 0
  %1143 = vmatpush.bf16.msra.mxu0 0
  %1144 = vmatpush.bf16.msra.mxu0 %v781
  %1145 = vmatpush.bf16.msra.mxu0 %v780
  %1146 = vmatmul.bf16.gmra.mxu0 %v1136
  %v1147 = vpop.f32.mrf.mxu0
  %v1148 = vadd.f32 0.0, %v1147
  %v1149 = vpop.f32.mrf.mxu0
  %1150 = vdwg.mxu0
  %v1151 = vadd.f32 %v1130, %v1148
  %v1152 = vxor.u32 %v1151, 2147483648
  %v1153 = vmul.f32 %v1152, 1.442695
  %v1154 = vpow.pop %v1153
  %v1155 = vadd.f32 %v1154, 1.0
  %v1156 = vrcp.pop %v1155
  %v1157 = vmul.f32 %v1155, %v1156
  %v1158 = vsub.f32 1.0, %v1157
  %v1159 = vmul.f32 %v1156, %v1158
  %v1160 = vadd.f32 %v1156, %v1159
  %vm1161 = vweird.f32 %v1155
  %vm1162 = vweird.f32 %v1156
  %vm1163 = vmor %vm1161, %vm1162
  %v1164 = vsel %vm1163, %v1156, %v1160
  %v1165 = vand.u32 2147483647, %v1155
  %vm1166 = vcmp.eq.f32.partialorder %v1165, 8.507059e+37
  %v1167 = vand.u32 %v1155, 2147483648
  %v1168 = vor.u32 1.1754944e-38, %v1167
  %v1169 = vsel %vm1166, %v1168, %v1164
  %v1170 = vmul.f32 1.0, %v1169
  %v1171 = vtanh.pop %v1151
  %v1172 = vmul.f32 %v1170, %v1123
  %1174 = vrot.lane.b32.xlu0 %v1171, 64
  %v1175 = vpop.permute.xlu0 %1174
  %v1177 = vmul.f32 %v1170, %v1175
  %1179 = vrot.lane.b32.xlu0 %v1177, 32
  %v1180 = vpop.permute.xlu0 %1179
  %v1182 = vadd.f32 %v1172, %v1180
  %v1183 = vtanh.pop %v1182
  %1185 = vrot.lane.b32.xlu0 %v1183, 64
  %v1186 = vpop.permute.xlu0 %1185
  %v1188 = vmul.f32 %v1170, %v1186
  %v1189 = vld [vmem:[%s620] sm:$0xff]
  %v1190 = vpack.c.bf16 %v1188, %v1188
  %1192 = vrot.lane.b32.xlu0 %v1190, 32
  %v1193 = vpop.permute.xlu0 %1192
  %v1195 = vsel %vm164, %v1193, 0
  %1197 = vmatpush.bf16.msra.mxu0 0
  %1198 = vmatpush.bf16.msra.mxu0 0
  %1199 = vmatpush.bf16.msra.mxu0 0
  %1200 = vmatpush.bf16.msra.mxu0 0
  %1201 = vmatpush.bf16.msra.mxu0 0
  %1202 = vmatpush.bf16.msra.mxu0 0
  %1203 = vmatpush.bf16.msra.mxu0 %v781
  %1204 = vmatpush.bf16.msra.mxu0 %v780
  %1205 = vmatmul.bf16.gmra.mxu0 %v1195
  %v1206 = vpop.f32.mrf.mxu0
  %v1207 = vadd.f32 0.0, %v1206
  %v1208 = vpop.f32.mrf.mxu0
  %1209 = vdwg.mxu0
  %v1210 = vadd.f32 %v1189, %v1207
  %v1211 = vxor.u32 %v1210, 2147483648
  %v1212 = vmul.f32 %v1211, 1.442695
  %v1213 = vpow.pop %v1212
  %v1214 = vadd.f32 %v1213, 1.0
  %v1215 = vrcp.pop %v1214
  %v1216 = vmul.f32 %v1214, %v1215
  %v1217 = vsub.f32 1.0, %v1216
  %v1218 = vmul.f32 %v1215, %v1217
  %v1219 = vadd.f32 %v1215, %v1218
  %vm1220 = vweird.f32 %v1214
  %vm1221 = vweird.f32 %v1215
  %vm1222 = vmor %vm1220, %vm1221
  %v1223 = vsel %vm1222, %v1215, %v1219
  %v1224 = vand.u32 2147483647, %v1214
  %vm1225 = vcmp.eq.f32.partialorder %v1224, 8.507059e+37
  %v1226 = vand.u32 %v1214, 2147483648
  %v1227 = vor.u32 1.1754944e-38, %v1226
  %v1228 = vsel %vm1225, %v1227, %v1223
  %v1229 = vmul.f32 1.0, %v1228
  %v1230 = vtanh.pop %v1210
  %v1231 = vmul.f32 %v1229, %v1182
  %1233 = vrot.lane.b32.xlu0 %v1230, 64
  %v1234 = vpop.permute.xlu0 %1233
  %v1236 = vmul.f32 %v1229, %v1234
  %1238 = vrot.lane.b32.xlu0 %v1236, 32
  %v1239 = vpop.permute.xlu0 %1238
  %v1241 = vadd.f32 %v1231, %v1239
  %v1242 = vtanh.pop %v1241
  %1244 = vrot.lane.b32.xlu0 %v1242, 64
  %v1245 = vpop.permute.xlu0 %1244
  %v1247 = vmul.f32 %v1229, %v1245
  %v1248 = vld [vmem:[%s7] sm:$0xff]
  %v1249 = vld [vmem:[%s7 + $0x8] sm:$0xff]
  %v1250 = vld [vmem:[%s7 + $0x10] sm:$0xff]
  %v1251 = vld [vmem:[%s7 + $0x18] sm:$0xff]
  %v1252 = vld [vmem:[%s8] sm:$0x1]
  %v1254 = vperm.slane %v1252, 0
  %1257 = vrot.lane.b32.xlu0 %v1247, 32
  %v1258 = vpop.permute.xlu0 %1257
  %v1259 = vsel %vm164, %v1258, 0
  %1261 = vmatpush.msra.mxu0 0.0
  %1262 = vmatpush.msra.mxu0 0.0
  %1263 = vmatpush.msra.mxu0 0.0
  %1264 = vmatpush.msra.mxu0 0.0
  %1265 = vmatpush.msra.mxu0 0.0
  %1266 = vmatpush.msra.mxu0 0.0
  %1267 = vmatpush.msra.mxu0 0.0
  %1268 = vmatpush.msra.mxu0 0.0
  %1269 = vmatpush.msra.mxu0 0.0
  %1270 = vmatpush.msra.mxu0 0.0
  %1271 = vmatpush.msra.mxu0 0.0
  %1272 = vmatpush.msra.mxu0 0.0
  %1273 = vmatpush.msra.mxu0 %v1251
  %1274 = vmatpush.msra.mxu0 %v1250
  %1275 = vmatpush.msra.mxu0 %v1249
  %1276 = vmatpush.msra.mxu0 %v1248
  %1277 = vmatmul.f32.gmra.mxu0 %v1259
  %v1278 = vpop.f32.mrf.mxu0
  %v1279 = vadd.f32 %v1254, %v1278
  %1280 = vdwg.mxu0
  %v1281 = vxor.u32 %v1279, 2147483648
  %v1282 = vmul.f32 %v1281, 1.442695
  %v1283 = vpow.pop %v1282
  %v1284 = vadd.f32 %v1283, 1.0
  %v1285 = vrcp.pop %v1284
  %v1286 = vmul.f32 %v1284, %v1285
  %v1287 = vsub.f32 1.0, %v1286
  %v1288 = vmul.f32 %v1285, %v1287
  %v1289 = vadd.f32 %v1285, %v1288
  %vm1290 = vweird.f32 %v1284
  %vm1291 = vweird.f32 %v1285
  %vm1292 = vmor %vm1290, %vm1291
  %v1293 = vsel %vm1292, %v1285, %v1289
  %v1294 = vand.u32 2147483647, %v1284
  %vm1295 = vcmp.eq.f32.partialorder %v1294, 8.507059e+37
  %v1296 = vand.u32 %v1284, 2147483648
  %v1297 = vor.u32 1.1754944e-38, %v1296
  %v1298 = vsel %vm1295, %v1297, %v1293
  %v1299 = vmul.f32 1.0, %v1298
  %vm1300 = vcmask 39936
  %1301 = vst.msk [vmem:[%s9] sm:$0xff] %vm1300, %v1299
  // Predicated region
  $region38: #{lstm_forward.1} parent=0 // pred_check
    _
  $region39: #{lstm_forward.1} parent=0 // pred_check_branch
    %1303 = sbr.rel (0) target = $region41
  $region40: #{lstm_forward.1} parent=0 // pred_region
    _
  $region41: #{lstm_forward.1} parent=0 // pred_fallthru
    _
  // Predicated region
  $region42: #{lstm_forward.1} parent=0 // pred_check
    _
  $region43: #{lstm_forward.1} parent=0 // pred_check_branch
    %1305 = sbr.rel (0) target = $region45
  $region44: #{lstm_forward.1} parent=0 // pred_region
    _
  $region45: #{lstm_forward.1} parent=0 // pred_fallthru
    _

</llo_original>
